<compile_context>
chip_gen: v6e
topology: v6e:2x2x1
jax: 0.10.0
libtpu: 0.0.40
codegen_flags: <defaults>
</compile_context>

<pallas_src>
import jax
import jax.numpy as jnp
from jax import lax
from jax.experimental import pallas as pl
from jax.experimental.pallas import tpu as pltpu

VIEW_L1_COEFF = 1.0
EPS = 1e-6          # reduce_masked_mean eps
L2NORM_EPS = 1e-12  # F.normalize eps


# --------------------------------- Fused ViewNet kernel ---------------------------------
def viewnet_fused_kernel(x_ref, rgbg_ref, valid_ref,
                         w3_ref, b3_ref, w2_ref, b2_ref,
                         wemb_ref, bemb_ref, wrgb_ref, brgb_ref,
                         rgbe_ref, embe_ref, wloss_ref):
    # Stage 1: 1x1x1 conv3d (C -> mid) + ReLU, expressed as one matmul with the
    # block-diagonal depth-expanded weight: (mid*D, C*D) @ (C*D, ts) -> (mid*D, ts).
    h3 = jnp.dot(w3_ref[...], x_ref[...], preferred_element_type=jnp.float32)
    h3 = jnp.maximum(h3 + b3_ref[...], 0.0)

    # Stage 2: depth-collapse + 1x1 conv2d (mid*D -> mid) + ReLU: (mid, ts).
    hid = jnp.dot(w2_ref[...], h3, preferred_element_type=jnp.float32)
    hid = jnp.maximum(hid + b2_ref[...], 0.0)

    # emb head (mid -> feat_dim) + channel-wise L2 normalize (F.normalize semantics).
    emb = jnp.dot(wemb_ref[...], hid, preferred_element_type=jnp.float32) + bemb_ref[...]
    ssq = jnp.sum(emb * emb, axis=0, keepdims=True)                   # (1, ts)
    inv = jnp.minimum(lax.rsqrt(ssq), 1.0 / L2NORM_EPS)               # == 1/max(||emb||, eps)
    embe_ref[...] = (emb * inv).astype(embe_ref.dtype)

    # rgb head (mid -> 3), tanh * 0.5.
    rgb = jnp.dot(wrgb_ref[...], hid, preferred_element_type=jnp.float32) + brgb_ref[...]
    rgb = jnp.tanh(rgb) * 0.5
    rgbe_ref[...] = rgb.astype(rgbe_ref.dtype)

    # l1_on_axis over channel * valid -> lane-dense per-pixel map (reduced in wrapper).
    loss = jnp.sum(jnp.abs(rgb - rgbg_ref[...]), axis=0, keepdims=True)  # (1, ts)
    wloss_ref[...] = (loss * valid_ref[...]).astype(wloss_ref.dtype)


def _pick_tile(hw, cap=2048):
    assert hw % 128 == 0, "H*W must be a multiple of 128"
    t = min(hw, cap)
    while hw % t:
        t -= 128
    return t


def viewnet_fused(x, rgbg, valid, w3_big, b3, w2t, b2, wembt, bemb, wrgbt, brgb,
                  *, tile_s=None):
    # x: (B, C*D, HW)  rgbg: (B, 3, HW)  valid: (B, 1, HW)   (channel-major, lane = HW)
    B, CD, HW = x.shape
    midD = w3_big.shape[0]
    mid = w2t.shape[0]
    feat_dim = wembt.shape[0]
    if tile_s is None:
        tile_s = _pick_tile(HW)
    grid = (B, HW // tile_s)

    def tiled(c):
        return pl.BlockSpec((None, c, tile_s), lambda b, s: (b, 0, s))

    def whole(shape):
        # Full-array weight block with a constant index_map -> stays resident in VMEM.
        return pl.BlockSpec(shape, lambda b, s: (0, 0))

    out_shape = (
        jax.ShapeDtypeStruct((B, 3, HW), jnp.float32),         # rgb_e  (channel-major)
        jax.ShapeDtypeStruct((B, feat_dim, HW), jnp.float32),  # emb_e  (channel-major)
        jax.ShapeDtypeStruct((B, 1, HW), jnp.float32),         # loss_im * valid
    )
    return pl.pallas_call(
        viewnet_fused_kernel,
        out_shape=out_shape,
        grid=grid,
        in_specs=[
            tiled(CD), tiled(3), tiled(1),
            whole((midD, CD)), whole((midD, 1)),
            whole((mid, midD)), whole((mid, 1)),
            whole((feat_dim, mid)), whole((feat_dim, 1)),
            whole((3, mid)), whole((3, 1)),
        ],
        out_specs=[tiled(3), tiled(feat_dim), tiled(1)],
        compiler_params=pltpu.CompilerParams(
            dimension_semantics=("parallel", "parallel")),
    )(x, rgbg, valid, w3_big, b3, w2t, b2, wembt, bemb, wrgbt, brgb)


# -------------------------------- Parameters (deterministic) -----------------------------
def init_params(feat_dim, depth, mid=32):
    key = jax.random.PRNGKey(42)
    ks = jax.random.split(key, 8)
    scale = lambda fan_in: 1.0 / jnp.sqrt(jnp.float32(fan_in))
    return dict(
        w3d=jax.random.normal(ks[0], (feat_dim, mid), jnp.float32) * scale(feat_dim),
        b3d=jax.random.normal(ks[1], (1, mid), jnp.float32) * 0.01,
        w2d=jax.random.normal(ks[2], (mid * depth, mid), jnp.float32) * scale(mid * depth),
        b2d=jax.random.normal(ks[3], (1, mid), jnp.float32) * 0.01,
        w_emb=jax.random.normal(ks[4], (mid, feat_dim), jnp.float32) * scale(mid),
        b_emb=jax.random.normal(ks[5], (1, feat_dim), jnp.float32) * 0.01,
        w_rgb=jax.random.normal(ks[6], (mid, 3), jnp.float32) * scale(mid),
        b_rgb=jax.random.normal(ks[7], (1, 3), jnp.float32) * 0.01,
    )


# ------------------------------------- Forward wrapper -----------------------------------
@jax.jit
def view_net_forward(feat, rgb_g, valid, params):
    """feat: (B, C, D, H, W)  rgb_g: (B, 3, H, W)  valid: (B, 1, H, W)  (PyTorch layouts)."""
    B, C, D, H, W = feat.shape
    HW = H * W
    mid = params["w3d"].shape[1]
    feat_dim = params["w_emb"].shape[1]

    # ---- tiny one-time weight packing into kernel (channel-major) layouts ----
    w3t = params["w3d"].T                                               # (mid, C)
    eye = jnp.eye(D, dtype=jnp.float32)
    # W3_big[o*D+d, c*D+d'] = w3d[c, o] * (d == d')  — block-diagonal depth expansion.
    w3_big = (w3t[:, None, :, None] * eye[None, :, None, :]).reshape(mid * D, C * D)
    b3 = jnp.repeat(params["b3d"].reshape(-1), D).reshape(mid * D, 1)   # b3[o*D+d] = b3d[o]
    w2t = params["w2d"].T                                               # (mid, mid*D)
    b2 = params["b2d"].reshape(mid, 1)
    wembt = params["w_emb"].T                                           # (feat_dim, mid)
    bemb = params["b_emb"].reshape(feat_dim, 1)
    wrgbt = params["w_rgb"].T                                           # (3, mid)
    brgb = params["b_rgb"].reshape(3, 1)

    # Free reshapes only (contiguous-dim collapses, no transposes).
    x = feat.reshape(B, C * D, HW)        # row index = c*D + d  (matches torch .view)
    rgbg = rgb_g.reshape(B, 3, HW)
    val = valid.reshape(B, 1, HW)

    rgb_rows, emb_rows, wloss = viewnet_fused(
        x, rgbg, val, w3_big, b3, w2t, b2, wembt, bemb, wrgbt, brgb)

    rgb_loss = jnp.sum(wloss) / (jnp.sum(val) + EPS)   # reduce_masked_mean
    total_loss = VIEW_L1_COEFF * rgb_loss              # add_loss with coeff

    rgb_e = rgb_rows.reshape(B, 3, H, W)
    emb_e = emb_rows.reshape(B, feat_dim, H, W)
    return total_loss, rgb_e, emb_e


# ------------------------------- Pure-JAX reference (check) ------------------------------
def view_net_reference(feat, rgb_g, valid, params):
    B, C, D, H, W = feat.shape
    mid = params["w3d"].shape[1]
    feat_dim = params["w_emb"].shape[1]
    h3 = jnp.einsum('bcdhw,cm->bmdhw', feat, params["w3d"]) \
        + params["b3d"].reshape(1, mid, 1, 1, 1)
    h3 = jnp.maximum(h3, 0.0).reshape(B, mid * D, H, W)
    hid = jnp.einsum('bkhw,km->bmhw', h3, params["w2d"]) + params["b2d"].reshape(1, mid, 1, 1)
    hid = jnp.maximum(hid, 0.0)
    emb = jnp.einsum('bmhw,me->behw', hid, params["w_emb"]) \
        + params["b_emb"].reshape(1, feat_dim, 1, 1)
    rgb = jnp.einsum('bmhw,mr->brhw', hid, params["w_rgb"]) + params["b_rgb"].reshape(1, 3, 1, 1)
    norm = jnp.sqrt(jnp.sum(emb * emb, axis=1, keepdims=True))
    emb = emb / jnp.maximum(norm, L2NORM_EPS)
    rgb = jnp.tanh(rgb) * 0.5
    loss_im = jnp.sum(jnp.abs(rgb - rgb_g), axis=1, keepdims=True)
    rgb_loss = jnp.sum(loss_im * valid) / (jnp.sum(valid) + EPS)
    return VIEW_L1_COEFF * rgb_loss, rgb, emb


if __name__ == "__main__":
    B, C, D, H, W = 2, 4, 8, 16, 16   # feat_dim=4, view_depth=8
    key = jax.random.PRNGKey(0)
    k1, k2, k3 = jax.random.split(key, 3)
    feat = jax.random.normal(k1, (B, C, D, H, W), jnp.float32)
    rgb_g = jax.random.uniform(k2, (B, 3, H, W), jnp.float32, minval=-0.5, maxval=0.5)
    valid = (jax.random.uniform(k3, (B, 1, H, W), jnp.float32) > 0.3).astype(jnp.float32)

    params = init_params(feat_dim=C, depth=D)
    total_loss, rgb_e, emb_e = view_net_forward(feat, rgb_g, valid, params)
    jax.block_until_ready((total_loss, rgb_e, emb_e))

    assert rgb_e.shape == (B, 3, H, W) and emb_e.shape == (B, C, H, W)
    assert bool(jnp.isfinite(total_loss))

    # Loose-tolerance check vs. a pure-JAX reference (MXU f32 matmul precision differs
    # slightly from XLA einsum defaults, so tolerances are deliberately generous).
    ref_loss, ref_rgb, ref_emb = view_net_reference(feat, rgb_g, valid, params)
    assert float(jnp.max(jnp.abs(rgb_e - ref_rgb))) < 5e-2
    assert float(jnp.max(jnp.abs(emb_e - ref_emb))) < 5e-2
    assert abs(float(total_loss) - float(ref_loss)) < 5e-2

    print("KERNEL_OK")
</pallas_src>

<mosaic_0001>
module attributes {stable_mosaic.version = 11 : i64} {
  func.func @viewnet_fused_kernel(%arg0: i32, %arg1: i32, %arg2: memref<1x32x256xf32, #tpu.memory_space<vmem>>, %arg3: memref<1x3x256xf32, #tpu.memory_space<vmem>>, %arg4: memref<1x1x256xf32, #tpu.memory_space<vmem>>, %arg5: memref<256x32xf32, #tpu.memory_space<vmem>>, %arg6: memref<256x1xf32, #tpu.memory_space<vmem>>, %arg7: memref<32x256xf32, #tpu.memory_space<vmem>>, %arg8: memref<32x1xf32, #tpu.memory_space<vmem>>, %arg9: memref<4x32xf32, #tpu.memory_space<vmem>>, %arg10: memref<4x1xf32, #tpu.memory_space<vmem>>, %arg11: memref<3x32xf32, #tpu.memory_space<vmem>>, %arg12: memref<3x1xf32, #tpu.memory_space<vmem>>, %arg13: memref<1x3x256xf32, #tpu.memory_space<vmem>>, %arg14: memref<1x4x256xf32, #tpu.memory_space<vmem>>, %arg15: memref<1x1x256xf32, #tpu.memory_space<vmem>>) attributes {dimension_semantics = [#tpu.dimension_semantics<parallel>, #tpu.dimension_semantics<parallel>], iteration_bounds = array<i64: 2, 1>, scalar_prefetch = 0 : i64, scratch_operands = 0 : i64, tpu.core_type = #tpu.core_type<tc>, window_params = [{transform_indices = @transform_0, window_bounds = array<i64: 1, 32, 256>}, {transform_indices = @transform_1, window_bounds = array<i64: 1, 3, 256>}, {transform_indices = @transform_2, window_bounds = array<i64: 1, 1, 256>}, {pipeline_mode = #tpu.pipeline_mode<synchronous>, transform_indices = @transform_3, window_bounds = array<i64: 256, 32>}, {pipeline_mode = #tpu.pipeline_mode<synchronous>, transform_indices = @transform_4, window_bounds = array<i64: 256, 1>}, {pipeline_mode = #tpu.pipeline_mode<synchronous>, transform_indices = @transform_5, window_bounds = array<i64: 32, 256>}, {pipeline_mode = #tpu.pipeline_mode<synchronous>, transform_indices = @transform_6, window_bounds = array<i64: 32, 1>}, {pipeline_mode = #tpu.pipeline_mode<synchronous>, transform_indices = @transform_7, window_bounds = array<i64: 4, 32>}, {pipeline_mode = #tpu.pipeline_mode<synchronous>, transform_indices = @transform_8, window_bounds = array<i64: 4, 1>}, {pipeline_mode = #tpu.pipeline_mode<synchronous>, transform_indices = @transform_9, window_bounds = array<i64: 3, 32>}, {pipeline_mode = #tpu.pipeline_mode<synchronous>, transform_indices = @transform_10, window_bounds = array<i64: 3, 1>}, {transform_indices = @transform_11, window_bounds = array<i64: 1, 3, 256>}, {transform_indices = @transform_12, window_bounds = array<i64: 1, 4, 256>}, {transform_indices = @transform_13, window_bounds = array<i64: 1, 1, 256>}]} {
    %c0 = arith.constant 0 : index
    %c0_0 = arith.constant 0 : index
    %0 = vector.load %arg5[%c0, %c0_0] : memref<256x32xf32, #tpu.memory_space<vmem>>, vector<256x32xf32>
    %c0_1 = arith.constant 0 : index
    %c0_2 = arith.constant 0 : index
    %c0_3 = arith.constant 0 : index
    %1 = vector.load %arg2[%c0_1, %c0_2, %c0_3] : memref<1x32x256xf32, #tpu.memory_space<vmem>>, vector<1x32x256xf32>
    %2 = vector.shape_cast %1 : vector<1x32x256xf32> to vector<32x256xf32>
    %cst = arith.constant dense<0.000000e+00> : vector<256x256xf32>
    %3 = tpu.matmul %0, %2, %cst {dimension_numbers = #tpu.dot_dimension_numbers<[1], [0], [0], [1], [0, 0, 1, 1], [], []>} : vector<256x32xf32>, vector<32x256xf32>, vector<256x256xf32> -> vector<256x256xf32>
    %c0_4 = arith.constant 0 : index
    %c0_5 = arith.constant 0 : index
    %4 = vector.load %arg6[%c0_4, %c0_5] : memref<256x1xf32, #tpu.memory_space<vmem>>, vector<256x1xf32>
    %5 = vector.broadcast %4 : vector<256x1xf32> to vector<256x256xf32>
    %6 = arith.addf %3, %5 : vector<256x256xf32>
    %cst_6 = arith.constant 0.000000e+00 : f32
    %7 = vector.broadcast %cst_6 : f32 to vector<256x256xf32>
    %8 = arith.maximumf %6, %7 : vector<256x256xf32>
    %c0_7 = arith.constant 0 : index
    %c0_8 = arith.constant 0 : index
    %9 = vector.load %arg7[%c0_7, %c0_8] : memref<32x256xf32, #tpu.memory_space<vmem>>, vector<32x256xf32>
    %cst_9 = arith.constant dense<0.000000e+00> : vector<32x256xf32>
    %10 = tpu.matmul %9, %8, %cst_9 {dimension_numbers = #tpu.dot_dimension_numbers<[1], [0], [0], [1], [0, 0, 1, 1], [], []>} : vector<32x256xf32>, vector<256x256xf32>, vector<32x256xf32> -> vector<32x256xf32>
    %c0_10 = arith.constant 0 : index
    %c0_11 = arith.constant 0 : index
    %11 = vector.load %arg8[%c0_10, %c0_11] : memref<32x1xf32, #tpu.memory_space<vmem>>, vector<32x1xf32>
    %12 = vector.broadcast %11 : vector<32x1xf32> to vector<32x256xf32>
    %13 = arith.addf %10, %12 : vector<32x256xf32>
    %cst_12 = arith.constant 0.000000e+00 : f32
    %14 = vector.broadcast %cst_12 : f32 to vector<32x256xf32>
    %15 = arith.maximumf %13, %14 : vector<32x256xf32>
    %c0_13 = arith.constant 0 : index
    %c0_14 = arith.constant 0 : index
    %16 = vector.load %arg9[%c0_13, %c0_14] : memref<4x32xf32, #tpu.memory_space<vmem>>, vector<4x32xf32>
    %cst_15 = arith.constant dense<0.000000e+00> : vector<4x256xf32>
    %17 = tpu.matmul %16, %15, %cst_15 {dimension_numbers = #tpu.dot_dimension_numbers<[1], [0], [0], [1], [0, 0, 1, 1], [], []>} : vector<4x32xf32>, vector<32x256xf32>, vector<4x256xf32> -> vector<4x256xf32>
    %c0_16 = arith.constant 0 : index
    %c0_17 = arith.constant 0 : index
    %18 = vector.load %arg10[%c0_16, %c0_17] : memref<4x1xf32, #tpu.memory_space<vmem>>, vector<4x1xf32>
    %19 = vector.broadcast %18 : vector<4x1xf32> to vector<4x256xf32>
    %20 = arith.addf %17, %19 : vector<4x256xf32>
    %21 = arith.mulf %20, %20 : vector<4x256xf32>
    %cst_18 = arith.constant dense<0.000000e+00> : vector<256xf32>
    %22 = vector.multi_reduction <add>, %21, %cst_18 [0] : vector<4x256xf32> to vector<256xf32>
    %23 = vector.shape_cast %22 : vector<256xf32> to vector<1x256xf32>
    %24 = math.rsqrt %23 : vector<1x256xf32>
    %cst_19 = arith.constant 9.99999995E+11 : f32
    %25 = vector.broadcast %cst_19 : f32 to vector<1x256xf32>
    %26 = arith.minimumf %24, %25 : vector<1x256xf32>
    %27 = vector.broadcast %26 : vector<1x256xf32> to vector<4x256xf32>
    %28 = arith.mulf %20, %27 : vector<4x256xf32>
    %c0_20 = arith.constant 0 : index
    %c0_21 = arith.constant 0 : index
    %c0_22 = arith.constant 0 : index
    %29 = vector.load %arg14[%c0_20, %c0_21, %c0_22] : memref<1x4x256xf32, #tpu.memory_space<vmem>>, vector<1x4x256xf32>
    %30 = vector.shape_cast %29 : vector<1x4x256xf32> to vector<4x256xf32>
    %31 = vector.shape_cast %28 : vector<4x256xf32> to vector<1x4x256xf32>
    tpu.vector_store %arg14[%c0_20, %c0_21, %c0_22], %31 {strides = array<i32>} : memref<1x4x256xf32, #tpu.memory_space<vmem>>, vector<1x4x256xf32>,
    %c0_23 = arith.constant 0 : index
    %c0_24 = arith.constant 0 : index
    %32 = vector.load %arg11[%c0_23, %c0_24] : memref<3x32xf32, #tpu.memory_space<vmem>>, vector<3x32xf32>
    %cst_25 = arith.constant dense<0.000000e+00> : vector<3x256xf32>
    %33 = tpu.matmul %32, %15, %cst_25 {dimension_numbers = #tpu.dot_dimension_numbers<[1], [0], [0], [1], [0, 0, 1, 1], [], []>} : vector<3x32xf32>, vector<32x256xf32>, vector<3x256xf32> -> vector<3x256xf32>
    %c0_26 = arith.constant 0 : index
    %c0_27 = arith.constant 0 : index
    %34 = vector.load %arg12[%c0_26, %c0_27] : memref<3x1xf32, #tpu.memory_space<vmem>>, vector<3x1xf32>
    %35 = vector.broadcast %34 : vector<3x1xf32> to vector<3x256xf32>
    %36 = arith.addf %33, %35 : vector<3x256xf32>
    %37 = math.tanh %36 : vector<3x256xf32>
    %cst_28 = arith.constant 5.000000e-01 : f32
    %38 = vector.broadcast %cst_28 : f32 to vector<3x256xf32>
    %39 = arith.mulf %37, %38 : vector<3x256xf32>
    %c0_29 = arith.constant 0 : index
    %c0_30 = arith.constant 0 : index
    %c0_31 = arith.constant 0 : index
    %40 = vector.load %arg13[%c0_29, %c0_30, %c0_31] : memref<1x3x256xf32, #tpu.memory_space<vmem>>, vector<1x3x256xf32>
    %41 = vector.shape_cast %40 : vector<1x3x256xf32> to vector<3x256xf32>
    %42 = vector.shape_cast %39 : vector<3x256xf32> to vector<1x3x256xf32>
    tpu.vector_store %arg13[%c0_29, %c0_30, %c0_31], %42 {strides = array<i32>} : memref<1x3x256xf32, #tpu.memory_space<vmem>>, vector<1x3x256xf32>,
    %c0_32 = arith.constant 0 : index
    %c0_33 = arith.constant 0 : index
    %c0_34 = arith.constant 0 : index
    %43 = vector.load %arg3[%c0_32, %c0_33, %c0_34] : memref<1x3x256xf32, #tpu.memory_space<vmem>>, vector<1x3x256xf32>
    %44 = vector.shape_cast %43 : vector<1x3x256xf32> to vector<3x256xf32>
    %45 = arith.subf %39, %44 : vector<3x256xf32>
    %46 = math.absf %45 : vector<3x256xf32>
    %cst_35 = arith.constant dense<0.000000e+00> : vector<256xf32>
    %47 = vector.multi_reduction <add>, %46, %cst_35 [0] : vector<3x256xf32> to vector<256xf32>
    %48 = vector.shape_cast %47 : vector<256xf32> to vector<1x256xf32>
    %c0_36 = arith.constant 0 : index
    %c0_37 = arith.constant 0 : index
    %c0_38 = arith.constant 0 : index
    %49 = vector.load %arg4[%c0_36, %c0_37, %c0_38] : memref<1x1x256xf32, #tpu.memory_space<vmem>>, vector<1x1x256xf32>
    %50 = vector.shape_cast %49 : vector<1x1x256xf32> to vector<1x256xf32>
    %51 = arith.mulf %48, %50 : vector<1x256xf32>
    %c0_39 = arith.constant 0 : index
    %c0_40 = arith.constant 0 : index
    %c0_41 = arith.constant 0 : index
    %52 = vector.load %arg15[%c0_39, %c0_40, %c0_41] : memref<1x1x256xf32, #tpu.memory_space<vmem>>, vector<1x1x256xf32>
    %53 = vector.shape_cast %52 : vector<1x1x256xf32> to vector<1x256xf32>
    %54 = vector.shape_cast %51 : vector<1x256xf32> to vector<1x1x256xf32>
    tpu.vector_store %arg15[%c0_39, %c0_40, %c0_41], %54 {strides = array<i32>} : memref<1x1x256xf32, #tpu.memory_space<vmem>>, vector<1x1x256xf32>,
    return
  }
  func.func @transform_0(%arg0: i32, %arg1: i32) -> (i32, i32, i32) {
    %c0_i32 = arith.constant 0 : i32
    %c0_i32_0 = arith.constant 0 : i32
    return %arg0, %c0_i32, %arg1 : i32, i32, i32
  }
  func.func @transform_1(%arg0: i32, %arg1: i32) -> (i32, i32, i32) {
    %c0_i32 = arith.constant 0 : i32
    %c0_i32_0 = arith.constant 0 : i32
    return %arg0, %c0_i32, %arg1 : i32, i32, i32
  }
  func.func @transform_2(%arg0: i32, %arg1: i32) -> (i32, i32, i32) {
    %c0_i32 = arith.constant 0 : i32
    %c0_i32_0 = arith.constant 0 : i32
    return %arg0, %c0_i32, %arg1 : i32, i32, i32
  }
  func.func @transform_3(%arg0: i32, %arg1: i32) -> (i32, i32) {
    %c0_i32 = arith.constant 0 : i32
    %c0_i32_0 = arith.constant 0 : i32
    %c0_i32_1 = arith.constant 0 : i32
    return %c0_i32, %c0_i32_0 : i32, i32
  }
  func.func @transform_4(%arg0: i32, %arg1: i32) -> (i32, i32) {
    %c0_i32 = arith.constant 0 : i32
    %c0_i32_0 = arith.constant 0 : i32
    %c0_i32_1 = arith.constant 0 : i32
    return %c0_i32, %c0_i32_0 : i32, i32
  }
  func.func @transform_5(%arg0: i32, %arg1: i32) -> (i32, i32) {
    %c0_i32 = arith.constant 0 : i32
    %c0_i32_0 = arith.constant 0 : i32
    %c0_i32_1 = arith.constant 0 : i32
    return %c0_i32, %c0_i32_0 : i32, i32
  }
  func.func @transform_6(%arg0: i32, %arg1: i32) -> (i32, i32) {
    %c0_i32 = arith.constant 0 : i32
    %c0_i32_0 = arith.constant 0 : i32
    %c0_i32_1 = arith.constant 0 : i32
    return %c0_i32, %c0_i32_0 : i32, i32
  }
  func.func @transform_7(%arg0: i32, %arg1: i32) -> (i32, i32) {
    %c0_i32 = arith.constant 0 : i32
    %c0_i32_0 = arith.constant 0 : i32
    %c0_i32_1 = arith.constant 0 : i32
    return %c0_i32, %c0_i32_0 : i32, i32
  }
  func.func @transform_8(%arg0: i32, %arg1: i32) -> (i32, i32) {
    %c0_i32 = arith.constant 0 : i32
    %c0_i32_0 = arith.constant 0 : i32
    %c0_i32_1 = arith.constant 0 : i32
    return %c0_i32, %c0_i32_0 : i32, i32
  }
  func.func @transform_9(%arg0: i32, %arg1: i32) -> (i32, i32) {
    %c0_i32 = arith.constant 0 : i32
    %c0_i32_0 = arith.constant 0 : i32
    %c0_i32_1 = arith.constant 0 : i32
    return %c0_i32, %c0_i32_0 : i32, i32
  }
  func.func @transform_10(%arg0: i32, %arg1: i32) -> (i32, i32) {
    %c0_i32 = arith.constant 0 : i32
    %c0_i32_0 = arith.constant 0 : i32
    %c0_i32_1 = arith.constant 0 : i32
    return %c0_i32, %c0_i32_0 : i32, i32
  }
  func.func @transform_11(%arg0: i32, %arg1: i32) -> (i32, i32, i32) {
    %c0_i32 = arith.constant 0 : i32
    %c0_i32_0 = arith.constant 0 : i32
    return %arg0, %c0_i32, %arg1 : i32, i32, i32
  }
  func.func @transform_12(%arg0: i32, %arg1: i32) -> (i32, i32, i32) {
    %c0_i32 = arith.constant 0 : i32
    %c0_i32_0 = arith.constant 0 : i32
    return %arg0, %c0_i32, %arg1 : i32, i32, i32
  }
  func.func @transform_13(%arg0: i32, %arg1: i32) -> (i32, i32, i32) {
    %c0_i32 = arith.constant 0 : i32
    %c0_i32_0 = arith.constant 0 : i32
    return %arg0, %c0_i32, %arg1 : i32, i32, i32
  }
}

</mosaic_0001>

<llo_original>
// kernel: view_net_forward.1
$region0: #{view_net_forward.1}
  #allocation0 [shape = 'u32[]', space=smem, size = 0x4, offset = 0x4, fixed_abs, tag = 'smem constant byte address 0x4 - core index']
  #allocation1 [shape = 'u32[144,128]{1,0:T(1,128)}', space=vmem, size = 0x12000, scoped, tag = 'internal scratch']
  %s0 = inlined_call_operand.vmem [shape: f32[2,32,256], index: 0, kind: input, shape index: {}]
  %s1 = inlined_call_operand.vmem [shape: f32[2,3,256], index: 1, kind: input, shape index: {}]
  %s2 = inlined_call_operand.vmem [shape: f32[2,1,256], index: 2, kind: input, shape index: {}]
  %s3 = inlined_call_operand.vmem [shape: f32[256,32], index: 3, kind: input, shape index: {}]
  %s4 = inlined_call_operand.vmem [shape: f32[256,1], index: 4, kind: input, shape index: {}]
  %s5 = inlined_call_operand.vmem [shape: f32[32,256], index: 5, kind: input, shape index: {}]
  %s6 = inlined_call_operand.vmem [shape: f32[32,1], index: 6, kind: input, shape index: {}]
  %s7 = inlined_call_operand.vmem [shape: f32[4,32], index: 7, kind: input, shape index: {}]
  %s8 = inlined_call_operand.vmem [shape: f32[4,1], index: 8, kind: input, shape index: {}]
  %s9 = inlined_call_operand.vmem [shape: f32[3,32], index: 9, kind: input, shape index: {}]
  %s10 = inlined_call_operand.vmem [shape: f32[3,1], index: 10, kind: input, shape index: {}]
  %s11 = inlined_call_operand.vmem [shape: f32[2,3,256], index: 11, kind: output, shape index: {0}]
  %s12 = inlined_call_operand.vmem [shape: f32[2,4,256], index: 12, kind: output, shape index: {1}]
  %s13 = inlined_call_operand.vmem [shape: f32[2,1,256], index: 13, kind: output, shape index: {2}]
  %14 = xla_tuple %s11, %s12, %s13
  %s15 = sld [smem:[#allocation0]]
  $region93: #{view_net_forward.1} parent=0
    _
  %s17 = ssub.s32 1, %s15
  %s18 = scalar_select 0, %s17, %s15
  loop: start=0, step=1, limit=4
  $region2: #{view_net_forward.1} parent=0 // loop_pre_header
    _
  $region3: #{view_net_forward.1} parent=0 // loop_header
    %s20 = sphi 0, %s24
    %p21 = scmp.ge.s32.totalorder %s20, 4
    %s27 = sphi 0, %s39
    %s28 = sphi 0, %s35
    %s29 = sphi 0, %s27
    %s30 = sphi 0, %s28
    %s31 = sphi 0, %s29
    %s32 = sphi 0, %s30
    %s44 = sphi 0, %s46
    %s47 = sphi 0, %s44
    %s48 = sphi 0, %s47
    %s64 = sphi 0, %s48
    %s72 = sphi 0, %s74
    %s75 = sphi 0, %s72
    %s76 = sphi 0, %s75
    %s92 = sphi 0, %s76
    %s100 = sphi 0, %s102
    %s103 = sphi 0, %s100
    %s104 = sphi 0, %s103
    %s120 = sphi 0, %s104
    %s124 = sphi 0, %s124
    %s126 = sphi 0, %s124
    %s127 = sphi 0, %s126
    %s141 = sphi 0, %s127
    %s145 = sphi 0, %s145
    %s147 = sphi 0, %s145
    %s148 = sphi 0, %s147
    %s162 = sphi 0, %s148
    %s166 = sphi 0, %s166
    %s168 = sphi 0, %s166
    %s169 = sphi 0, %s168
    %s183 = sphi 0, %s169
    %s187 = sphi 0, %s187
    %s189 = sphi 0, %s187
    %s190 = sphi 0, %s189
    %s204 = sphi 0, %s190
    %s208 = sphi 0, %s208
    %s210 = sphi 0, %s208
    %s211 = sphi 0, %s210
    %s225 = sphi 0, %s211
    %s229 = sphi 0, %s229
    %s231 = sphi 0, %s229
    %s232 = sphi 0, %s231
    %s246 = sphi 0, %s232
    %s250 = sphi 0, %s250
    %s252 = sphi 0, %s250
    %s253 = sphi 0, %s252
    %s267 = sphi 0, %s253
    %s271 = sphi 0, %s271
    %s273 = sphi 0, %s271
    %s274 = sphi 0, %s273
    %s288 = sphi 0, %s274
    %s296 = sphi 0, %s298
    %s299 = sphi 0, %s296
    %s300 = sphi 0, %s299
    %s316 = sphi 0, %s300
    %s324 = sphi 0, %s326
    %s327 = sphi 0, %s324
    %s328 = sphi 0, %s327
    %s344 = sphi 0, %s328
    %s352 = sphi 0, %s354
    %s355 = sphi 0, %s352
    %s356 = sphi 0, %s355
    %s372 = sphi 0, %s356
  $region4: #{view_net_forward.1} parent=0 // loop_header_branch
    %23 = sbr.rel (%p21) target = $region8
  $region5: #{view_net_forward.1} parent=0 // loop_body
    %s25 = ssub.s32 %s20, 1
    %s26 = ssub.s32 %s20, 2
    %s33 = sadd.s32 1, %s28
    %p34 = scmp.ge.s32.totalorder %s33, 1
    %s35 = scalar_select %p34, 0, %s33
    %s36 = sadd.s32 1, %s27
    %s37 = scalar_select %p34, %s36, %s27
    %p38 = scmp.ge.s32.totalorder %s37, 2
    %s39 = scalar_select %p38, 0, %s37
    %s40 = ssub.s32 %s27, %s39
    %s41 = ssub.s32 %s28, %s35
    %s42 = sor.u32 %s40, %s41
    %p43 = scmp.eq.s32.totalorder %s42, 0
    %s45 = sadd.s32 %s44, 1
    %s46 = scalar_select %p43, %s44, %s45
    %p49 = pneg %p43
    %p50 = scmp.eq.s32.totalorder %s20, 1
    %p51 = por %p49, %p50
    %p52 = scmp.ne.s32.totalorder %s44, %s47
    %p53 = scmp.eq.s32.totalorder %s20, 0
    %p54 = por %p52, %p53
    %p55 = scmp.ne.s32.totalorder %s44, %s47
    %p56 = scmp.eq.s32.totalorder %s25, 1
    %p57 = por %p55, %p56
    %p58 = scmp.ne.s32.totalorder %s47, %s48
    %p59 = scmp.eq.s32.totalorder %s25, 0
    %p60 = por %p58, %p59
    %p61 = scmp.ne.s32.totalorder %s47, %s48
    %p62 = scmp.eq.s32.totalorder %s26, 1
    %p63 = por %p61, %p62
    %p65 = scmp.ne.s32.totalorder %s48, %s64
    %p66 = scmp.eq.s32.totalorder %s26, 0
    %p67 = por %p65, %p66
    %s68 = ssub.s32 %s27, %s39
    %s69 = ssub.s32 %s28, %s35
    %s70 = sor.u32 %s68, %s69
    %p71 = scmp.eq.s32.totalorder %s70, 0
    %s73 = sadd.s32 %s72, 1
    %s74 = scalar_select %p71, %s72, %s73
    %p77 = pneg %p71
    %p78 = scmp.eq.s32.totalorder %s20, 1
    %p79 = por %p77, %p78
    %p80 = scmp.ne.s32.totalorder %s72, %s75
    %p81 = scmp.eq.s32.totalorder %s20, 0
    %p82 = por %p80, %p81
    %p83 = scmp.ne.s32.totalorder %s72, %s75
    %p84 = scmp.eq.s32.totalorder %s25, 1
    %p85 = por %p83, %p84
    %p86 = scmp.ne.s32.totalorder %s75, %s76
    %p87 = scmp.eq.s32.totalorder %s25, 0
    %p88 = por %p86, %p87
    %p89 = scmp.ne.s32.totalorder %s75, %s76
    %p90 = scmp.eq.s32.totalorder %s26, 1
    %p91 = por %p89, %p90
    %p93 = scmp.ne.s32.totalorder %s76, %s92
    %p94 = scmp.eq.s32.totalorder %s26, 0
    %p95 = por %p93, %p94
    %s96 = ssub.s32 %s27, %s39
    %s97 = ssub.s32 %s28, %s35
    %s98 = sor.u32 %s96, %s97
    %p99 = scmp.eq.s32.totalorder %s98, 0
    %s101 = sadd.s32 %s100, 1
    %s102 = scalar_select %p99, %s100, %s101
    %p105 = pneg %p99
    %p106 = scmp.eq.s32.totalorder %s20, 1
    %p107 = por %p105, %p106
    %p108 = scmp.ne.s32.totalorder %s100, %s103
    %p109 = scmp.eq.s32.totalorder %s20, 0
    %p110 = por %p108, %p109
    %p111 = scmp.ne.s32.totalorder %s100, %s103
    %p112 = scmp.eq.s32.totalorder %s25, 1
    %p113 = por %p111, %p112
    %p114 = scmp.ne.s32.totalorder %s103, %s104
    %p115 = scmp.eq.s32.totalorder %s25, 0
    %p116 = por %p114, %p115
    %p117 = scmp.ne.s32.totalorder %s103, %s104
    %p118 = scmp.eq.s32.totalorder %s26, 1
    %p119 = por %p117, %p118
    %p121 = scmp.ne.s32.totalorder %s104, %s120
    %p122 = scmp.eq.s32.totalorder %s26, 0
    %p123 = por %p121, %p122
    %s125 = sadd.s32 %s124, 1
    %p128 = scmp.eq.s32.totalorder %s20, 1
    %p129 = scmp.ne.s32.totalorder %s124, %s126
    %p130 = scmp.eq.s32.totalorder %s20, 0
    %p131 = por %p129, %p130
    %p132 = scmp.ne.s32.totalorder %s124, %s126
    %p133 = scmp.eq.s32.totalorder %s25, 1
    %p134 = por %p132, %p133
    %p135 = scmp.ne.s32.totalorder %s126, %s127
    %p136 = scmp.eq.s32.totalorder %s25, 0
    %p137 = por %p135, %p136
    %p138 = scmp.ne.s32.totalorder %s126, %s127
    %p139 = scmp.eq.s32.totalorder %s26, 1
    %p140 = por %p138, %p139
    %p142 = scmp.ne.s32.totalorder %s127, %s141
    %p143 = scmp.eq.s32.totalorder %s26, 0
    %p144 = por %p142, %p143
    %s146 = sadd.s32 %s145, 1
    %p149 = scmp.eq.s32.totalorder %s20, 1
    %p150 = scmp.ne.s32.totalorder %s145, %s147
    %p151 = scmp.eq.s32.totalorder %s20, 0
    %p152 = por %p150, %p151
    %p153 = scmp.ne.s32.totalorder %s145, %s147
    %p154 = scmp.eq.s32.totalorder %s25, 1
    %p155 = por %p153, %p154
    %p156 = scmp.ne.s32.totalorder %s147, %s148
    %p157 = scmp.eq.s32.totalorder %s25, 0
    %p158 = por %p156, %p157
    %p159 = scmp.ne.s32.totalorder %s147, %s148
    %p160 = scmp.eq.s32.totalorder %s26, 1
    %p161 = por %p159, %p160
    %p163 = scmp.ne.s32.totalorder %s148, %s162
    %p164 = scmp.eq.s32.totalorder %s26, 0
    %p165 = por %p163, %p164
    %s167 = sadd.s32 %s166, 1
    %p170 = scmp.eq.s32.totalorder %s20, 1
    %p171 = scmp.ne.s32.totalorder %s166, %s168
    %p172 = scmp.eq.s32.totalorder %s20, 0
    %p173 = por %p171, %p172
    %p174 = scmp.ne.s32.totalorder %s166, %s168
    %p175 = scmp.eq.s32.totalorder %s25, 1
    %p176 = por %p174, %p175
    %p177 = scmp.ne.s32.totalorder %s168, %s169
    %p178 = scmp.eq.s32.totalorder %s25, 0
    %p179 = por %p177, %p178
    %p180 = scmp.ne.s32.totalorder %s168, %s169
    %p181 = scmp.eq.s32.totalorder %s26, 1
    %p182 = por %p180, %p181
    %p184 = scmp.ne.s32.totalorder %s169, %s183
    %p185 = scmp.eq.s32.totalorder %s26, 0
    %p186 = por %p184, %p185
    %s188 = sadd.s32 %s187, 1
    %p191 = scmp.eq.s32.totalorder %s20, 1
    %p192 = scmp.ne.s32.totalorder %s187, %s189
    %p193 = scmp.eq.s32.totalorder %s20, 0
    %p194 = por %p192, %p193
    %p195 = scmp.ne.s32.totalorder %s187, %s189
    %p196 = scmp.eq.s32.totalorder %s25, 1
    %p197 = por %p195, %p196
    %p198 = scmp.ne.s32.totalorder %s189, %s190
    %p199 = scmp.eq.s32.totalorder %s25, 0
    %p200 = por %p198, %p199
    %p201 = scmp.ne.s32.totalorder %s189, %s190
    %p202 = scmp.eq.s32.totalorder %s26, 1
    %p203 = por %p201, %p202
    %p205 = scmp.ne.s32.totalorder %s190, %s204
    %p206 = scmp.eq.s32.totalorder %s26, 0
    %p207 = por %p205, %p206
    %s209 = sadd.s32 %s208, 1
    %p212 = scmp.eq.s32.totalorder %s20, 1
    %p213 = scmp.ne.s32.totalorder %s208, %s210
    %p214 = scmp.eq.s32.totalorder %s20, 0
    %p215 = por %p213, %p214
    %p216 = scmp.ne.s32.totalorder %s208, %s210
    %p217 = scmp.eq.s32.totalorder %s25, 1
    %p218 = por %p216, %p217
    %p219 = scmp.ne.s32.totalorder %s210, %s211
    %p220 = scmp.eq.s32.totalorder %s25, 0
    %p221 = por %p219, %p220
    %p222 = scmp.ne.s32.totalorder %s210, %s211
    %p223 = scmp.eq.s32.totalorder %s26, 1
    %p224 = por %p222, %p223
    %p226 = scmp.ne.s32.totalorder %s211, %s225
    %p227 = scmp.eq.s32.totalorder %s26, 0
    %p228 = por %p226, %p227
    %s230 = sadd.s32 %s229, 1
    %p233 = scmp.eq.s32.totalorder %s20, 1
    %p234 = scmp.ne.s32.totalorder %s229, %s231
    %p235 = scmp.eq.s32.totalorder %s20, 0
    %p236 = por %p234, %p235
    %p237 = scmp.ne.s32.totalorder %s229, %s231
    %p238 = scmp.eq.s32.totalorder %s25, 1
    %p239 = por %p237, %p238
    %p240 = scmp.ne.s32.totalorder %s231, %s232
    %p241 = scmp.eq.s32.totalorder %s25, 0
    %p242 = por %p240, %p241
    %p243 = scmp.ne.s32.totalorder %s231, %s232
    %p244 = scmp.eq.s32.totalorder %s26, 1
    %p245 = por %p243, %p244
    %p247 = scmp.ne.s32.totalorder %s232, %s246
    %p248 = scmp.eq.s32.totalorder %s26, 0
    %p249 = por %p247, %p248
    %s251 = sadd.s32 %s250, 1
    %p254 = scmp.eq.s32.totalorder %s20, 1
    %p255 = scmp.ne.s32.totalorder %s250, %s252
    %p256 = scmp.eq.s32.totalorder %s20, 0
    %p257 = por %p255, %p256
    %p258 = scmp.ne.s32.totalorder %s250, %s252
    %p259 = scmp.eq.s32.totalorder %s25, 1
    %p260 = por %p258, %p259
    %p261 = scmp.ne.s32.totalorder %s252, %s253
    %p262 = scmp.eq.s32.totalorder %s25, 0
    %p263 = por %p261, %p262
    %p264 = scmp.ne.s32.totalorder %s252, %s253
    %p265 = scmp.eq.s32.totalorder %s26, 1
    %p266 = por %p264, %p265
    %p268 = scmp.ne.s32.totalorder %s253, %s267
    %p269 = scmp.eq.s32.totalorder %s26, 0
    %p270 = por %p268, %p269
    %s272 = sadd.s32 %s271, 1
    %p275 = scmp.eq.s32.totalorder %s20, 1
    %p276 = scmp.ne.s32.totalorder %s271, %s273
    %p277 = scmp.eq.s32.totalorder %s20, 0
    %p278 = por %p276, %p277
    %p279 = scmp.ne.s32.totalorder %s271, %s273
    %p280 = scmp.eq.s32.totalorder %s25, 1
    %p281 = por %p279, %p280
    %p282 = scmp.ne.s32.totalorder %s273, %s274
    %p283 = scmp.eq.s32.totalorder %s25, 0
    %p284 = por %p282, %p283
    %p285 = scmp.ne.s32.totalorder %s273, %s274
    %p286 = scmp.eq.s32.totalorder %s26, 1
    %p287 = por %p285, %p286
    %p289 = scmp.ne.s32.totalorder %s274, %s288
    %p290 = scmp.eq.s32.totalorder %s26, 0
    %p291 = por %p289, %p290
    %s292 = ssub.s32 %s27, %s39
    %s293 = ssub.s32 %s28, %s35
    %s294 = sor.u32 %s292, %s293
    %p295 = scmp.eq.s32.totalorder %s294, 0
    %s297 = sadd.s32 %s296, 1
    %s298 = scalar_select %p295, %s296, %s297
    %p301 = pneg %p295
    %p302 = scmp.eq.s32.totalorder %s20, 1
    %p303 = por %p301, %p302
    %p304 = scmp.ne.s32.totalorder %s296, %s299
    %p305 = scmp.eq.s32.totalorder %s20, 0
    %p306 = por %p304, %p305
    %p307 = scmp.ne.s32.totalorder %s296, %s299
    %p308 = scmp.eq.s32.totalorder %s25, 1
    %p309 = por %p307, %p308
    %p310 = scmp.ne.s32.totalorder %s299, %s300
    %p311 = scmp.eq.s32.totalorder %s25, 0
    %p312 = por %p310, %p311
    %p313 = scmp.ne.s32.totalorder %s299, %s300
    %p314 = scmp.eq.s32.totalorder %s26, 1
    %p315 = por %p313, %p314
    %p317 = scmp.ne.s32.totalorder %s300, %s316
    %p318 = scmp.eq.s32.totalorder %s26, 0
    %p319 = por %p317, %p318
    %s320 = ssub.s32 %s27, %s39
    %s321 = ssub.s32 %s28, %s35
    %s322 = sor.u32 %s320, %s321
    %p323 = scmp.eq.s32.totalorder %s322, 0
    %s325 = sadd.s32 %s324, 1
    %s326 = scalar_select %p323, %s324, %s325
    %p329 = pneg %p323
    %p330 = scmp.eq.s32.totalorder %s20, 1
    %p331 = por %p329, %p330
    %p332 = scmp.ne.s32.totalorder %s324, %s327
    %p333 = scmp.eq.s32.totalorder %s20, 0
    %p334 = por %p332, %p333
    %p335 = scmp.ne.s32.totalorder %s324, %s327
    %p336 = scmp.eq.s32.totalorder %s25, 1
    %p337 = por %p335, %p336
    %p338 = scmp.ne.s32.totalorder %s327, %s328
    %p339 = scmp.eq.s32.totalorder %s25, 0
    %p340 = por %p338, %p339
    %p341 = scmp.ne.s32.totalorder %s327, %s328
    %p342 = scmp.eq.s32.totalorder %s26, 1
    %p343 = por %p341, %p342
    %p345 = scmp.ne.s32.totalorder %s328, %s344
    %p346 = scmp.eq.s32.totalorder %s26, 0
    %p347 = por %p345, %p346
    %s348 = ssub.s32 %s27, %s39
    %s349 = ssub.s32 %s28, %s35
    %s350 = sor.u32 %s348, %s349
    %p351 = scmp.eq.s32.totalorder %s350, 0
    %s353 = sadd.s32 %s352, 1
    %s354 = scalar_select %p351, %s352, %s353
    %p357 = pneg %p351
    %p358 = scmp.eq.s32.totalorder %s20, 1
    %p359 = por %p357, %p358
    %p360 = scmp.ne.s32.totalorder %s352, %s355
    %p361 = scmp.eq.s32.totalorder %s20, 0
    %p362 = por %p360, %p361
    %p363 = scmp.ne.s32.totalorder %s352, %s355
    %p364 = scmp.eq.s32.totalorder %s25, 1
    %p365 = por %p363, %p364
    %p366 = scmp.ne.s32.totalorder %s355, %s356
    %p367 = scmp.eq.s32.totalorder %s25, 0
    %p368 = por %p366, %p367
    %p369 = scmp.ne.s32.totalorder %s355, %s356
    %p370 = scmp.eq.s32.totalorder %s26, 1
    %p371 = por %p369, %p370
    %p373 = scmp.ne.s32.totalorder %s356, %s372
    %p374 = scmp.eq.s32.totalorder %s26, 0
    %p375 = por %p373, %p374
    %p376 = scmp.le.s32.totalorder 1, %s20
    %p377 = scmp.lt.s32.totalorder %s20, 3
    %p378 = pnand %p376, %p377
    %p379 = pneg %p378
    // Predicated region
    $region9: #{view_net_forward.1} parent=5 // pred_check
      _
    $region10: #{view_net_forward.1} parent=5 // pred_check_branch
      %381 = sbr.rel (%p378) target = $region12
    $region11: #{view_net_forward.1} parent=5 // pred_region
      %s382 = ssub.s32 %s20, 1
      // Predicated region
      $region13: #{view_net_forward.1} parent=11 // pred_check
        %p383 = pneg %p137
      $region14: #{view_net_forward.1} parent=11 // pred_check_branch
        %385 = sbr.rel (%p383) target = $region16
      $region15: #{view_net_forward.1} parent=11 // pred_region
        _
      $region16: #{view_net_forward.1} parent=11 // pred_fallthru
        _
      // Predicated region
      $region17: #{view_net_forward.1} parent=11 // pred_check
        %p386 = pneg %p158
      $region18: #{view_net_forward.1} parent=11 // pred_check_branch
        %388 = sbr.rel (%p386) target = $region20
      $region19: #{view_net_forward.1} parent=11 // pred_region
        _
      $region20: #{view_net_forward.1} parent=11 // pred_fallthru
        _
      // Predicated region
      $region21: #{view_net_forward.1} parent=11 // pred_check
        %p389 = pneg %p179
      $region22: #{view_net_forward.1} parent=11 // pred_check_branch
        %391 = sbr.rel (%p389) target = $region24
      $region23: #{view_net_forward.1} parent=11 // pred_region
        _
      $region24: #{view_net_forward.1} parent=11 // pred_fallthru
        _
      // Predicated region
      $region25: #{view_net_forward.1} parent=11 // pred_check
        %p392 = pneg %p200
      $region26: #{view_net_forward.1} parent=11 // pred_check_branch
        %394 = sbr.rel (%p392) target = $region28
      $region27: #{view_net_forward.1} parent=11 // pred_region
        _
      $region28: #{view_net_forward.1} parent=11 // pred_fallthru
        _
      // Predicated region
      $region29: #{view_net_forward.1} parent=11 // pred_check
        %p395 = pneg %p221
      $region30: #{view_net_forward.1} parent=11 // pred_check_branch
        %397 = sbr.rel (%p395) target = $region32
      $region31: #{view_net_forward.1} parent=11 // pred_region
        _
      $region32: #{view_net_forward.1} parent=11 // pred_fallthru
        _
      // Predicated region
      $region33: #{view_net_forward.1} parent=11 // pred_check
        %p398 = pneg %p242
      $region34: #{view_net_forward.1} parent=11 // pred_check_branch
        %400 = sbr.rel (%p398) target = $region36
      $region35: #{view_net_forward.1} parent=11 // pred_region
        _
      $region36: #{view_net_forward.1} parent=11 // pred_fallthru
        _
      // Predicated region
      $region37: #{view_net_forward.1} parent=11 // pred_check
        %p401 = pneg %p263
      $region38: #{view_net_forward.1} parent=11 // pred_check_branch
        %403 = sbr.rel (%p401) target = $region40
      $region39: #{view_net_forward.1} parent=11 // pred_region
        _
      $region40: #{view_net_forward.1} parent=11 // pred_fallthru
        _
      // Predicated region
      $region41: #{view_net_forward.1} parent=11 // pred_check
        %p404 = pneg %p284
      $region42: #{view_net_forward.1} parent=11 // pred_check_branch
        %406 = sbr.rel (%p404) target = $region44
      $region43: #{view_net_forward.1} parent=11 // pred_region
        _
      $region44: #{view_net_forward.1} parent=11 // pred_fallthru
        _
    $region12: #{view_net_forward.1} parent=5 // pred_fallthru
      _
    %p407 = scmp.lt.s32.totalorder %s20, 2
    // Predicated region
    $region45: #{view_net_forward.1} parent=5 // pred_check
      %p408 = pneg %p407
    $region46: #{view_net_forward.1} parent=5 // pred_check_branch
      %410 = sbr.rel (%p408) target = $region48
    $region47: #{view_net_forward.1} parent=5 // pred_region
      // Predicated region
      $region49: #{view_net_forward.1} parent=47 // pred_check
        %p411 = pneg %p54
      $region50: #{view_net_forward.1} parent=47 // pred_check_branch
        %413 = sbr.rel (%p411) target = $region52
      $region51: #{view_net_forward.1} parent=47 // pred_region
        %s414 = smul.u32 2, %s28
        %p415 = scmp.lt.s32.totalorder %s27, 1
        %s416 = scalar_select %p415, %s27, 1
        %p417 = scmp.lt.s32.totalorder %s414, 1
        %s418 = scalar_select %p417, %s414, 1
        %s419 = smul.addr %s416, 8
        %s420 = sadd.s32 %s418, %s419
        %s421 = smul.addr %s420, 8
        %s422 = scalar_lea.vmem %s0, %s421
        %s423 = smul.u32 2, %s28
      $region52: #{view_net_forward.1} parent=47 // pred_fallthru
        _
      // Predicated region
      $region53: #{view_net_forward.1} parent=47 // pred_check
        %p424 = pneg %p82
      $region54: #{view_net_forward.1} parent=47 // pred_check_branch
        %426 = sbr.rel (%p424) target = $region56
      $region55: #{view_net_forward.1} parent=47 // pred_region
        %s427 = smul.u32 2, %s28
        %p428 = scmp.lt.s32.totalorder %s27, 1
        %s429 = scalar_select %p428, %s27, 1
        %p430 = scmp.lt.s32.totalorder %s427, 1
        %s431 = scalar_select %p430, %s427, 1
        %s432 = smul.addr %s429, 2
        %s433 = sadd.s32 %s431, %s432
        %s434 = smul.addr %s433, 4
        %s435 = scalar_lea.vmem %s1, %s434
        %s436 = smul.u32 2, %s28
      $region56: #{view_net_forward.1} parent=47 // pred_fallthru
        _
      // Predicated region
      $region57: #{view_net_forward.1} parent=47 // pred_check
        %p437 = pneg %p110
      $region58: #{view_net_forward.1} parent=47 // pred_check_branch
        %439 = sbr.rel (%p437) target = $region60
      $region59: #{view_net_forward.1} parent=47 // pred_region
        %s440 = smul.u32 2, %s28
        %p441 = scmp.lt.s32.totalorder %s27, 1
        %s442 = scalar_select %p441, %s27, 1
        %p443 = scmp.lt.s32.totalorder %s440, 1
        %s444 = scalar_select %p443, %s440, 1
        %s445 = smul.addr %s442, 2
        %s446 = sadd.s32 %s444, %s445
        %s447 = scalar_lea.vmem %s2, %s446
        %s448 = smul.u32 2, %s28
      $region60: #{view_net_forward.1} parent=47 // pred_fallthru
        _
    $region48: #{view_net_forward.1} parent=5 // pred_fallthru
      _
    %p449 = scmp.le.s32.totalorder 1, %s20
    %p450 = scmp.lt.s32.totalorder %s20, 3
    %p451 = pnand %p449, %p450
    %p452 = pneg %p451
    // Predicated region
    $region61: #{view_net_forward.1} parent=5 // pred_check
      _
    $region62: #{view_net_forward.1} parent=5 // pred_check_branch
      %454 = sbr.rel (%p451) target = $region64
    $region63: #{view_net_forward.1} parent=5 // pred_region
      %s455 = ssub.s32 %s20, 1
      %s456 = smul.u32 2, %s30
      %p457 = scmp.lt.s32.totalorder %s29, 1
      %s458 = scalar_select %p457, %s29, 1
      %p459 = scmp.lt.s32.totalorder %s456, 1
      %s460 = scalar_select %p459, %s456, 1
      %s461 = smul.addr %s458, 8
      %s462 = sadd.s32 %s460, %s461
      %s463 = smul.addr %s462, 8
      %s464 = scalar_lea.vmem %s0, %s463
      %p465 = pneg %p60
      %p466 = pneg %p57
      %s467 = smul.u32 2, %s30
      %p468 = scmp.lt.s32.totalorder %s29, 1
      %s469 = scalar_select %p468, %s29, 1
      %p470 = scmp.lt.s32.totalorder %s467, 1
      %s471 = scalar_select %p470, %s467, 1
      %s472 = smul.addr %s469, 2
      %s473 = sadd.s32 %s471, %s472
      %s474 = smul.addr %s473, 4
      %s475 = scalar_lea.vmem %s1, %s474
      %p476 = pneg %p88
      %p477 = pneg %p85
      %s478 = smul.u32 2, %s30
      %p479 = scmp.lt.s32.totalorder %s29, 1
      %s480 = scalar_select %p479, %s29, 1
      %p481 = scmp.lt.s32.totalorder %s478, 1
      %s482 = scalar_select %p481, %s478, 1
      %s483 = smul.addr %s480, 2
      %s484 = sadd.s32 %s482, %s483
      %s485 = scalar_lea.vmem %s2, %s484
      %p486 = pneg %p116
      %p487 = pneg %p113
      %p488 = pneg %p137
      %p489 = pneg %p134
      %p490 = pneg %p158
      %p491 = pneg %p155
      %p492 = pneg %p179
      %p493 = pneg %p176
      %p494 = pneg %p200
      %p495 = pneg %p197
      %p496 = pneg %p221
      %p497 = pneg %p218
      %p498 = pneg %p242
      %p499 = pneg %p239
      %p500 = pneg %p263
      %p501 = pneg %p260
      %p502 = pneg %p284
      %p503 = pneg %p281
      %p504 = pneg %p312
      %p505 = pneg %p309
      %s506 = smul.u32 2, %s30
      %p507 = scmp.lt.s32.totalorder %s29, 1
      %s508 = scalar_select %p507, %s29, 1
      %p509 = scmp.lt.s32.totalorder %s506, 1
      %s510 = scalar_select %p509, %s506, 1
      %s511 = smul.addr %s508, 2
      %s512 = sadd.s32 %s510, %s511
      %s513 = smul.addr %s512, 4
      %s514 = scalar_lea.vmem %s11, %s513
      %p515 = pneg %p340
      %p516 = pneg %p337
      %s517 = smul.u32 2, %s30
      %p518 = scmp.lt.s32.totalorder %s29, 1
      %s519 = scalar_select %p518, %s29, 1
      %p520 = scmp.lt.s32.totalorder %s517, 1
      %s521 = scalar_select %p520, %s517, 1
      %s522 = smul.addr %s519, 2
      %s523 = sadd.s32 %s521, %s522
      %s524 = smul.addr %s523, 4
      %s525 = scalar_lea.vmem %s12, %s524
      %p526 = pneg %p368
      %p527 = pneg %p365
      %s528 = smul.u32 2, %s30
      %p529 = scmp.lt.s32.totalorder %s29, 1
      %s530 = scalar_select %p529, %s29, 1
      %p531 = scmp.lt.s32.totalorder %s528, 1
      %s532 = scalar_select %p531, %s528, 1
      %s533 = smul.addr %s530, 2
      %s534 = sadd.s32 %s532, %s533
      %s535 = scalar_lea.vmem %s13, %s534
      %s536 = smul.u32 2, %s30
      %p537 = scmp.lt.s32.totalorder %s29, 1
      %s538 = scalar_select %p537, %s29, 1
      %p539 = scmp.lt.s32.totalorder %s536, 1
      %s540 = scalar_select %p539, %s536, 1
      %s541 = smul.addr %s538, 8
      %s542 = sadd.s32 %s540, %s541
      %s543 = smul.addr %s542, 8
      %s544 = scalar_lea.vmem %s0, %s543
      %s545 = smul.u32 2, %s30
      %s546 = smul.u32 2, %s30
      %p547 = scmp.lt.s32.totalorder %s29, 1
      %s548 = scalar_select %p547, %s29, 1
      %p549 = scmp.lt.s32.totalorder %s546, 1
      %s550 = scalar_select %p549, %s546, 1
      %s551 = smul.addr %s548, 2
      %s552 = sadd.s32 %s550, %s551
      %s553 = smul.addr %s552, 4
      %s554 = scalar_lea.vmem %s1, %s553
      %s555 = smul.u32 2, %s30
      %s556 = smul.u32 2, %s30
      %p557 = scmp.lt.s32.totalorder %s29, 1
      %s558 = scalar_select %p557, %s29, 1
      %p559 = scmp.lt.s32.totalorder %s556, 1
      %s560 = scalar_select %p559, %s556, 1
      %s561 = smul.addr %s558, 2
      %s562 = sadd.s32 %s560, %s561
      %s563 = scalar_lea.vmem %s2, %s562
      %s564 = smul.u32 2, %s30
      %s565 = smul.u32 2, %s30
      %p566 = scmp.lt.s32.totalorder %s29, 1
      %s567 = scalar_select %p566, %s29, 1
      %p568 = scmp.lt.s32.totalorder %s565, 1
      %s569 = scalar_select %p568, %s565, 1
      %s570 = smul.addr %s567, 2
      %s571 = sadd.s32 %s569, %s570
      %s572 = smul.addr %s571, 4
      %s573 = scalar_lea.vmem %s11, %s572
      %s574 = smul.u32 2, %s30
      %s575 = smul.u32 2, %s30
      %p576 = scmp.lt.s32.totalorder %s29, 1
      %s577 = scalar_select %p576, %s29, 1
      %p578 = scmp.lt.s32.totalorder %s575, 1
      %s579 = scalar_select %p578, %s575, 1
      %s580 = smul.addr %s577, 2
      %s581 = sadd.s32 %s579, %s580
      %s582 = smul.addr %s581, 4
      %s583 = scalar_lea.vmem %s12, %s582
      %s584 = smul.u32 2, %s30
      %s585 = smul.u32 2, %s30
      %p586 = scmp.lt.s32.totalorder %s29, 1
      %s587 = scalar_select %p586, %s29, 1
      %p588 = scmp.lt.s32.totalorder %s585, 1
      %s589 = scalar_select %p588, %s585, 1
      %s590 = smul.addr %s587, 2
      %s591 = sadd.s32 %s589, %s590
      %s592 = scalar_lea.vmem %s13, %s591
      %s593 = smul.u32 2, %s30
      %v594 = vld [vmem:[%s3] sm:$0xff]
      %v595 = vld [vmem:[%s3 + $0x8] sm:$0xff]
      %v596 = vld [vmem:[%s3 + $0x10] sm:$0xff]
      %v597 = vld [vmem:[%s3 + $0x18] sm:$0xff]
      %v598 = vld [vmem:[%s3 + $0x20] sm:$0xff]
      %v599 = vld [vmem:[%s3 + $0x28] sm:$0xff]
      %v600 = vld [vmem:[%s3 + $0x30] sm:$0xff]
      %v601 = vld [vmem:[%s3 + $0x38] sm:$0xff]
      %v602 = vld [vmem:[%s3 + $0x40] sm:$0xff]
      %v603 = vld [vmem:[%s3 + $0x48] sm:$0xff]
      %v604 = vld [vmem:[%s3 + $0x50] sm:$0xff]
      %v605 = vld [vmem:[%s3 + $0x58] sm:$0xff]
      %v606 = vld [vmem:[%s3 + $0x60] sm:$0xff]
      %v607 = vld [vmem:[%s3 + $0x68] sm:$0xff]
      %v608 = vld [vmem:[%s3 + $0x70] sm:$0xff]
      %v609 = vld [vmem:[%s3 + $0x78] sm:$0xff]
      %v610 = vld [vmem:[%s3 + $0x80] sm:$0xff]
      %v611 = vld [vmem:[%s3 + $0x88] sm:$0xff]
      %v612 = vld [vmem:[%s3 + $0x90] sm:$0xff]
      %v613 = vld [vmem:[%s3 + $0x98] sm:$0xff]
      %v614 = vld [vmem:[%s3 + $0xa0] sm:$0xff]
      %v615 = vld [vmem:[%s3 + $0xa8] sm:$0xff]
      %v616 = vld [vmem:[%s3 + $0xb0] sm:$0xff]
      %v617 = vld [vmem:[%s3 + $0xb8] sm:$0xff]
      %v618 = vld [vmem:[%s3 + $0xc0] sm:$0xff]
      %v619 = vld [vmem:[%s3 + $0xc8] sm:$0xff]
      %v620 = vld [vmem:[%s3 + $0xd0] sm:$0xff]
      %v621 = vld [vmem:[%s3 + $0xd8] sm:$0xff]
      %v622 = vld [vmem:[%s3 + $0xe0] sm:$0xff]
      %v623 = vld [vmem:[%s3 + $0xe8] sm:$0xff]
      %v624 = vld [vmem:[%s3 + $0xf0] sm:$0xff]
      %v625 = vld [vmem:[%s3 + $0xf8] sm:$0xff]
      %v626 = vld [vmem:[%s544] sm:$0xff]
      %v627 = vld [vmem:[%s544 + $0x8] sm:$0xff]
      %v628 = vld [vmem:[%s544 + $0x10] sm:$0xff]
      %v629 = vld [vmem:[%s544 + $0x18] sm:$0xff]
      %v630 = vld [vmem:[%s544 + $0x20] sm:$0xff]
      %v631 = vld [vmem:[%s544 + $0x28] sm:$0xff]
      %v632 = vld [vmem:[%s544 + $0x30] sm:$0xff]
      %v633 = vld [vmem:[%s544 + $0x38] sm:$0xff]
      %v634 = vld [vmem:[%s4] sm:$0xff]
      %v635 = vld [vmem:[%s4 + $0x8] sm:$0xff]
      %v636 = vld [vmem:[%s4 + $0x10] sm:$0xff]
      %v637 = vld [vmem:[%s4 + $0x18] sm:$0xff]
      %v638 = vld [vmem:[%s4 + $0x20] sm:$0xff]
      %v639 = vld [vmem:[%s4 + $0x28] sm:$0xff]
      %v640 = vld [vmem:[%s4 + $0x30] sm:$0xff]
      %v641 = vld [vmem:[%s4 + $0x38] sm:$0xff]
      %v642 = vld [vmem:[%s4 + $0x40] sm:$0xff]
      %v643 = vld [vmem:[%s4 + $0x48] sm:$0xff]
      %v644 = vld [vmem:[%s4 + $0x50] sm:$0xff]
      %v645 = vld [vmem:[%s4 + $0x58] sm:$0xff]
      %v646 = vld [vmem:[%s4 + $0x60] sm:$0xff]
      %v647 = vld [vmem:[%s4 + $0x68] sm:$0xff]
      %v648 = vld [vmem:[%s4 + $0x70] sm:$0xff]
      %v649 = vld [vmem:[%s4 + $0x78] sm:$0xff]
      %v650 = vld [vmem:[%s4 + $0x80] sm:$0xff]
      %v651 = vld [vmem:[%s4 + $0x88] sm:$0xff]
      %v652 = vld [vmem:[%s4 + $0x90] sm:$0xff]
      %v653 = vld [vmem:[%s4 + $0x98] sm:$0xff]
      %v654 = vld [vmem:[%s4 + $0xa0] sm:$0xff]
      %v655 = vld [vmem:[%s4 + $0xa8] sm:$0xff]
      %v656 = vld [vmem:[%s4 + $0xb0] sm:$0xff]
      %v657 = vld [vmem:[%s4 + $0xb8] sm:$0xff]
      %v658 = vld [vmem:[%s4 + $0xc0] sm:$0xff]
      %v659 = vld [vmem:[%s4 + $0xc8] sm:$0xff]
      %v660 = vld [vmem:[%s4 + $0xd0] sm:$0xff]
      %v661 = vld [vmem:[%s4 + $0xd8] sm:$0xff]
      %v662 = vld [vmem:[%s4 + $0xe0] sm:$0xff]
      %v663 = vld [vmem:[%s4 + $0xe8] sm:$0xff]
      %v664 = vld [vmem:[%s4 + $0xf0] sm:$0xff]
      %v665 = vld [vmem:[%s4 + $0xf8] sm:$0xff]
      %667 = vset.pattern.permute.xlu0 0
      %668 = vperm.xlu0 %667, %v634
      %v669 = vpop.permute.xlu0 %668
      %672 = vset.pattern.permute.xlu0 0
      %673 = vperm.xlu0 %672, %v635
      %v674 = vpop.permute.xlu0 %673
      %677 = vset.pattern.permute.xlu0 0
      %678 = vperm.xlu0 %677, %v636
      %v679 = vpop.permute.xlu0 %678
      %682 = vset.pattern.permute.xlu0 0
      %683 = vperm.xlu0 %682, %v637
      %v684 = vpop.permute.xlu0 %683
      %687 = vset.pattern.permute.xlu0 0
      %688 = vperm.xlu0 %687, %v638
      %v689 = vpop.permute.xlu0 %688
      %692 = vset.pattern.permute.xlu0 0
      %693 = vperm.xlu0 %692, %v639
      %v694 = vpop.permute.xlu0 %693
      %697 = vset.pattern.permute.xlu0 0
      %698 = vperm.xlu0 %697, %v640
      %v699 = vpop.permute.xlu0 %698
      %702 = vset.pattern.permute.xlu0 0
      %703 = vperm.xlu0 %702, %v641
      %v704 = vpop.permute.xlu0 %703
      %707 = vset.pattern.permute.xlu0 0
      %708 = vperm.xlu0 %707, %v642
      %v709 = vpop.permute.xlu0 %708
      %712 = vset.pattern.permute.xlu0 0
      %713 = vperm.xlu0 %712, %v643
      %v714 = vpop.permute.xlu0 %713
      %717 = vset.pattern.permute.xlu0 0
      %718 = vperm.xlu0 %717, %v644
      %v719 = vpop.permute.xlu0 %718
      %722 = vset.pattern.permute.xlu0 0
      %723 = vperm.xlu0 %722, %v645
      %v724 = vpop.permute.xlu0 %723
      %727 = vset.pattern.permute.xlu0 0
      %728 = vperm.xlu0 %727, %v646
      %v729 = vpop.permute.xlu0 %728
      %732 = vset.pattern.permute.xlu0 0
      %733 = vperm.xlu0 %732, %v647
      %v734 = vpop.permute.xlu0 %733
      %737 = vset.pattern.permute.xlu0 0
      %738 = vperm.xlu0 %737, %v648
      %v739 = vpop.permute.xlu0 %738
      %742 = vset.pattern.permute.xlu0 0
      %743 = vperm.xlu0 %742, %v649
      %v744 = vpop.permute.xlu0 %743
      %747 = vset.pattern.permute.xlu0 0
      %748 = vperm.xlu0 %747, %v650
      %v749 = vpop.permute.xlu0 %748
      %752 = vset.pattern.permute.xlu0 0
      %753 = vperm.xlu0 %752, %v651
      %v754 = vpop.permute.xlu0 %753
      %757 = vset.pattern.permute.xlu0 0
      %758 = vperm.xlu0 %757, %v652
      %v759 = vpop.permute.xlu0 %758
      %762 = vset.pattern.permute.xlu0 0
      %763 = vperm.xlu0 %762, %v653
      %v764 = vpop.permute.xlu0 %763
      %767 = vset.pattern.permute.xlu0 0
      %768 = vperm.xlu0 %767, %v654
      %v769 = vpop.permute.xlu0 %768
      %772 = vset.pattern.permute.xlu0 0
      %773 = vperm.xlu0 %772, %v655
      %v774 = vpop.permute.xlu0 %773
      %777 = vset.pattern.permute.xlu0 0
      %778 = vperm.xlu0 %777, %v656
      %v779 = vpop.permute.xlu0 %778
      %782 = vset.pattern.permute.xlu0 0
      %783 = vperm.xlu0 %782, %v657
      %v784 = vpop.permute.xlu0 %783
      %787 = vset.pattern.permute.xlu0 0
      %788 = vperm.xlu0 %787, %v658
      %v789 = vpop.permute.xlu0 %788
      %792 = vset.pattern.permute.xlu0 0
      %793 = vperm.xlu0 %792, %v659
      %v794 = vpop.permute.xlu0 %793
      %797 = vset.pattern.permute.xlu0 0
      %798 = vperm.xlu0 %797, %v660
      %v799 = vpop.permute.xlu0 %798
      %802 = vset.pattern.permute.xlu0 0
      %803 = vperm.xlu0 %802, %v661
      %v804 = vpop.permute.xlu0 %803
      %807 = vset.pattern.permute.xlu0 0
      %808 = vperm.xlu0 %807, %v662
      %v809 = vpop.permute.xlu0 %808
      %812 = vset.pattern.permute.xlu0 0
      %813 = vperm.xlu0 %812, %v663
      %v814 = vpop.permute.xlu0 %813
      %817 = vset.pattern.permute.xlu0 0
      %818 = vperm.xlu0 %817, %v664
      %v819 = vpop.permute.xlu0 %818
      %822 = vset.pattern.permute.xlu0 0
      %823 = vperm.xlu0 %822, %v665
      %v824 = vpop.permute.xlu0 %823
      %vm826 = vcmask 261120
      %v828 = vsel %vm826, %v594, 0
      %v831 = vsel %vm826, %v595, 0
      %v834 = vsel %vm826, %v596, 0
      %v837 = vsel %vm826, %v597, 0
      %v840 = vsel %vm826, %v598, 0
      %v843 = vsel %vm826, %v599, 0
      %v846 = vsel %vm826, %v600, 0
      %v849 = vsel %vm826, %v601, 0
      %v852 = vsel %vm826, %v602, 0
      %v855 = vsel %vm826, %v603, 0
      %v858 = vsel %vm826, %v604, 0
      %v861 = vsel %vm826, %v605, 0
      %v864 = vsel %vm826, %v606, 0
      %v867 = vsel %vm826, %v607, 0
      %v870 = vsel %vm826, %v608, 0
      %v873 = vsel %vm826, %v609, 0
      %v876 = vsel %vm826, %v610, 0
      %v879 = vsel %vm826, %v611, 0
      %v882 = vsel %vm826, %v612, 0
      %v885 = vsel %vm826, %v613, 0
      %v888 = vsel %vm826, %v614, 0
      %v891 = vsel %vm826, %v615, 0
      %v894 = vsel %vm826, %v616, 0
      %v897 = vsel %vm826, %v617, 0
      %v900 = vsel %vm826, %v618, 0
      %v903 = vsel %vm826, %v619, 0
      %v906 = vsel %vm826, %v620, 0
      %v909 = vsel %vm826, %v621, 0
      %v912 = vsel %vm826, %v622, 0
      %v915 = vsel %vm826, %v623, 0
      %v918 = vsel %vm826, %v624, 0
      %v921 = vsel %vm826, %v625, 0
      %923 = vmatprep.subr.mxu0 0.0
      %924 = vmatpush1.msra.mxu0 0.0
      %925 = vmatprep.subr.mxu0 0.0
      %926 = vmatpush1.msra.mxu0 0.0
      %927 = vmatprep.subr.mxu0 0.0
      %928 = vmatpush1.msra.mxu0 0.0
      %929 = vmatprep.subr.mxu0 0.0
      %930 = vmatpush1.msra.mxu0 0.0
      %931 = vmatprep.subr.mxu0 0.0
      %932 = vmatpush1.msra.mxu0 0.0
      %933 = vmatprep.subr.mxu0 0.0
      %934 = vmatpush1.msra.mxu0 0.0
      %935 = vmatprep.subr.mxu0 0.0
      %936 = vmatpush1.msra.mxu0 0.0
      %937 = vmatprep.subr.mxu0 0.0
      %938 = vmatpush1.msra.mxu0 0.0
      %939 = vmatprep.subr.mxu0 0.0
      %940 = vmatpush1.msra.mxu0 0.0
      %941 = vmatprep.subr.mxu0 0.0
      %942 = vmatpush1.msra.mxu0 0.0
      %943 = vmatprep.subr.mxu0 0.0
      %944 = vmatpush1.msra.mxu0 0.0
      %945 = vmatprep.subr.mxu0 0.0
      %946 = vmatpush1.msra.mxu0 0.0
      %947 = vmatprep.subr.mxu0 %v633
      %948 = vmatpush1.msra.mxu0 %v632
      %949 = vmatprep.subr.mxu0 %v631
      %950 = vmatpush1.msra.mxu0 %v630
      %951 = vmatprep.subr.mxu0 %v629
      %952 = vmatpush1.msra.mxu0 %v628
      %953 = vmatprep.subr.mxu0 %v627
      %954 = vmatpush1.msra.mxu0 %v626
      %955 = vmatprep.subr.mxu0 0.0
      %956 = vmatpush2.msra.mxu0 0.0
      %957 = vmatprep.subr.mxu0 0.0
      %958 = vmatpush2.msra.mxu0 0.0
      %959 = vmatprep.subr.mxu0 0.0
      %960 = vmatpush2.msra.mxu0 0.0
      %961 = vmatprep.subr.mxu0 0.0
      %962 = vmatpush2.msra.mxu0 0.0
      %963 = vmatprep.subr.mxu0 0.0
      %964 = vmatpush2.msra.mxu0 0.0
      %965 = vmatprep.subr.mxu0 0.0
      %966 = vmatpush2.msra.mxu0 0.0
      %967 = vmatprep.subr.mxu0 0.0
      %968 = vmatpush2.msra.mxu0 0.0
      %969 = vmatprep.subr.mxu0 0.0
      %970 = vmatpush2.msra.mxu0 0.0
      %971 = vmatprep.subr.mxu0 0.0
      %972 = vmatpush2.msra.mxu0 0.0
      %973 = vmatprep.subr.mxu0 0.0
      %974 = vmatpush2.msra.mxu0 0.0
      %975 = vmatprep.subr.mxu0 0.0
      %976 = vmatpush2.msra.mxu0 0.0
      %977 = vmatprep.subr.mxu0 0.0
      %978 = vmatpush2.msra.mxu0 0.0
      %979 = vmatprep.subr.mxu0 0.0
      %980 = vmatpush2.msra.mxu0 0.0
      %981 = vmatprep.subr.mxu0 0.0
      %982 = vmatpush2.msra.mxu0 0.0
      %983 = vmatprep.subr.mxu0 0.0
      %984 = vmatpush2.msra.mxu0 0.0
      %985 = vmatprep.subr.mxu0 0.0
      %986 = vmatpush2.msra.mxu0 0.0
      %987 = vmatprep.mubr.f32.mxu0 0.0
      %988 = vmatmul.mubr.f32.gmra.mxu0 %v828
      %v989 = vpop.f32.mrf.mxu0
      %v990 = vadd.f32 %v669, %v989
      %v991 = vpop.f32.mrf.mxu0
      %v992 = vadd.f32 %v669, %v991
      %993 = vmatprep.mubr.f32.mxu0 0.0
      %994 = vmatmul.mubr.f32.gmra.mxu0 %v831
      %v995 = vpop.f32.mrf.mxu0
      %v996 = vadd.f32 %v674, %v995
      %v997 = vpop.f32.mrf.mxu0
      %v998 = vadd.f32 %v674, %v997
      %999 = vmatprep.mubr.f32.mxu0 0.0
      %1000 = vmatmul.mubr.f32.gmra.mxu0 %v834
      %v1001 = vpop.f32.mrf.mxu0
      %v1002 = vadd.f32 %v679, %v1001
      %v1003 = vpop.f32.mrf.mxu0
      %v1004 = vadd.f32 %v679, %v1003
      %1005 = vmatprep.mubr.f32.mxu0 0.0
      %1006 = vmatmul.mubr.f32.gmra.mxu0 %v837
      %v1007 = vpop.f32.mrf.mxu0
      %v1008 = vadd.f32 %v684, %v1007
      %v1009 = vpop.f32.mrf.mxu0
      %v1010 = vadd.f32 %v684, %v1009
      %1011 = vmatprep.mubr.f32.mxu0 0.0
      %1012 = vmatmul.mubr.f32.gmra.mxu0 %v840
      %v1013 = vpop.f32.mrf.mxu0
      %v1014 = vadd.f32 %v689, %v1013
      %v1015 = vpop.f32.mrf.mxu0
      %v1016 = vadd.f32 %v689, %v1015
      %1017 = vmatprep.mubr.f32.mxu0 0.0
      %1018 = vmatmul.mubr.f32.gmra.mxu0 %v843
      %v1019 = vpop.f32.mrf.mxu0
      %v1020 = vadd.f32 %v694, %v1019
      %v1021 = vpop.f32.mrf.mxu0
      %v1022 = vadd.f32 %v694, %v1021
      %1023 = vmatprep.mubr.f32.mxu0 0.0
      %1024 = vmatmul.mubr.f32.gmra.mxu0 %v846
      %v1025 = vpop.f32.mrf.mxu0
      %v1026 = vadd.f32 %v699, %v1025
      %v1027 = vpop.f32.mrf.mxu0
      %v1028 = vadd.f32 %v699, %v1027
      %1029 = vmatprep.mubr.f32.mxu0 0.0
      %1030 = vmatmul.mubr.f32.gmra.mxu0 %v849
      %v1031 = vpop.f32.mrf.mxu0
      %v1032 = vadd.f32 %v704, %v1031
      %v1033 = vpop.f32.mrf.mxu0
      %v1034 = vadd.f32 %v704, %v1033
      %1035 = vmatprep.mubr.f32.mxu0 0.0
      %1036 = vmatmul.mubr.f32.gmra.mxu0 %v852
      %v1037 = vpop.f32.mrf.mxu0
      %v1038 = vadd.f32 %v709, %v1037
      %v1039 = vpop.f32.mrf.mxu0
      %v1040 = vadd.f32 %v709, %v1039
      %1041 = vmatprep.mubr.f32.mxu0 0.0
      %1042 = vmatmul.mubr.f32.gmra.mxu0 %v855
      %v1043 = vpop.f32.mrf.mxu0
      %v1044 = vadd.f32 %v714, %v1043
      %v1045 = vpop.f32.mrf.mxu0
      %v1046 = vadd.f32 %v714, %v1045
      %1047 = vmatprep.mubr.f32.mxu0 0.0
      %1048 = vmatmul.mubr.f32.gmra.mxu0 %v858
      %v1049 = vpop.f32.mrf.mxu0
      %v1050 = vadd.f32 %v719, %v1049
      %v1051 = vpop.f32.mrf.mxu0
      %v1052 = vadd.f32 %v719, %v1051
      %1053 = vmatprep.mubr.f32.mxu0 0.0
      %1054 = vmatmul.mubr.f32.gmra.mxu0 %v861
      %v1055 = vpop.f32.mrf.mxu0
      %v1056 = vadd.f32 %v724, %v1055
      %v1057 = vpop.f32.mrf.mxu0
      %v1058 = vadd.f32 %v724, %v1057
      %1059 = vmatprep.mubr.f32.mxu0 0.0
      %1060 = vmatmul.mubr.f32.gmra.mxu0 %v864
      %v1061 = vpop.f32.mrf.mxu0
      %v1062 = vadd.f32 %v729, %v1061
      %v1063 = vpop.f32.mrf.mxu0
      %v1064 = vadd.f32 %v729, %v1063
      %1065 = vmatprep.mubr.f32.mxu0 0.0
      %1066 = vmatmul.mubr.f32.gmra.mxu0 %v867
      %v1067 = vpop.f32.mrf.mxu0
      %v1068 = vadd.f32 %v734, %v1067
      %v1069 = vpop.f32.mrf.mxu0
      %v1070 = vadd.f32 %v734, %v1069
      %1071 = vmatprep.mubr.f32.mxu0 0.0
      %1072 = vmatmul.mubr.f32.gmra.mxu0 %v870
      %v1073 = vpop.f32.mrf.mxu0
      %v1074 = vadd.f32 %v739, %v1073
      %v1075 = vpop.f32.mrf.mxu0
      %v1076 = vadd.f32 %v739, %v1075
      %1077 = vmatprep.mubr.f32.mxu0 0.0
      %1078 = vmatmul.mubr.f32.gmra.mxu0 %v873
      %v1079 = vpop.f32.mrf.mxu0
      %v1080 = vadd.f32 %v744, %v1079
      %v1081 = vpop.f32.mrf.mxu0
      %v1082 = vadd.f32 %v744, %v1081
      %1083 = vmatprep.mubr.f32.mxu0 0.0
      %1084 = vmatmul.mubr.f32.gmra.mxu0 %v876
      %v1085 = vpop.f32.mrf.mxu0
      %v1086 = vadd.f32 %v749, %v1085
      %v1087 = vpop.f32.mrf.mxu0
      %v1088 = vadd.f32 %v749, %v1087
      %1089 = vmatprep.mubr.f32.mxu0 0.0
      %1090 = vmatmul.mubr.f32.gmra.mxu0 %v879
      %v1091 = vpop.f32.mrf.mxu0
      %v1092 = vadd.f32 %v754, %v1091
      %v1093 = vpop.f32.mrf.mxu0
      %v1094 = vadd.f32 %v754, %v1093
      %1095 = vmatprep.mubr.f32.mxu0 0.0
      %1096 = vmatmul.mubr.f32.gmra.mxu0 %v882
      %v1097 = vpop.f32.mrf.mxu0
      %v1098 = vadd.f32 %v759, %v1097
      %v1099 = vpop.f32.mrf.mxu0
      %v1100 = vadd.f32 %v759, %v1099
      %1101 = vmatprep.mubr.f32.mxu0 0.0
      %1102 = vmatmul.mubr.f32.gmra.mxu0 %v885
      %v1103 = vpop.f32.mrf.mxu0
      %v1104 = vadd.f32 %v764, %v1103
      %v1105 = vpop.f32.mrf.mxu0
      %v1106 = vadd.f32 %v764, %v1105
      %1107 = vmatprep.mubr.f32.mxu0 0.0
      %1108 = vmatmul.mubr.f32.gmra.mxu0 %v888
      %v1109 = vpop.f32.mrf.mxu0
      %v1110 = vadd.f32 %v769, %v1109
      %v1111 = vpop.f32.mrf.mxu0
      %v1112 = vadd.f32 %v769, %v1111
      %1113 = vmatprep.mubr.f32.mxu0 0.0
      %1114 = vmatmul.mubr.f32.gmra.mxu0 %v891
      %v1115 = vpop.f32.mrf.mxu0
      %v1116 = vadd.f32 %v774, %v1115
      %v1117 = vpop.f32.mrf.mxu0
      %v1118 = vadd.f32 %v774, %v1117
      %1119 = vmatprep.mubr.f32.mxu0 0.0
      %1120 = vmatmul.mubr.f32.gmra.mxu0 %v894
      %v1121 = vpop.f32.mrf.mxu0
      %v1122 = vadd.f32 %v779, %v1121
      %v1123 = vpop.f32.mrf.mxu0
      %v1124 = vadd.f32 %v779, %v1123
      %1125 = vmatprep.mubr.f32.mxu0 0.0
      %1126 = vmatmul.mubr.f32.gmra.mxu0 %v897
      %v1127 = vpop.f32.mrf.mxu0
      %v1128 = vadd.f32 %v784, %v1127
      %v1129 = vpop.f32.mrf.mxu0
      %v1130 = vadd.f32 %v784, %v1129
      %1131 = vmatprep.mubr.f32.mxu0 0.0
      %1132 = vmatmul.mubr.f32.gmra.mxu0 %v900
      %v1133 = vpop.f32.mrf.mxu0
      %v1134 = vadd.f32 %v789, %v1133
      %v1135 = vpop.f32.mrf.mxu0
      %v1136 = vadd.f32 %v789, %v1135
      %1137 = vmatprep.mubr.f32.mxu0 0.0
      %1138 = vmatmul.mubr.f32.gmra.mxu0 %v903
      %v1139 = vpop.f32.mrf.mxu0
      %v1140 = vadd.f32 %v794, %v1139
      %v1141 = vpop.f32.mrf.mxu0
      %v1142 = vadd.f32 %v794, %v1141
      %1143 = vmatprep.mubr.f32.mxu0 0.0
      %1144 = vmatmul.mubr.f32.gmra.mxu0 %v906
      %v1145 = vpop.f32.mrf.mxu0
      %v1146 = vadd.f32 %v799, %v1145
      %v1147 = vpop.f32.mrf.mxu0
      %v1148 = vadd.f32 %v799, %v1147
      %1149 = vmatprep.mubr.f32.mxu0 0.0
      %1150 = vmatmul.mubr.f32.gmra.mxu0 %v909
      %v1151 = vpop.f32.mrf.mxu0
      %v1152 = vadd.f32 %v804, %v1151
      %v1153 = vpop.f32.mrf.mxu0
      %v1154 = vadd.f32 %v804, %v1153
      %1155 = vmatprep.mubr.f32.mxu0 0.0
      %1156 = vmatmul.mubr.f32.gmra.mxu0 %v912
      %v1157 = vpop.f32.mrf.mxu0
      %v1158 = vadd.f32 %v809, %v1157
      %v1159 = vpop.f32.mrf.mxu0
      %v1160 = vadd.f32 %v809, %v1159
      %1161 = vmatprep.mubr.f32.mxu0 0.0
      %1162 = vmatmul.mubr.f32.gmra.mxu0 %v915
      %v1163 = vpop.f32.mrf.mxu0
      %v1164 = vadd.f32 %v814, %v1163
      %v1165 = vpop.f32.mrf.mxu0
      %v1166 = vadd.f32 %v814, %v1165
      %1167 = vmatprep.mubr.f32.mxu0 0.0
      %1168 = vmatmul.mubr.f32.gmra.mxu0 %v918
      %v1169 = vpop.f32.mrf.mxu0
      %v1170 = vadd.f32 %v819, %v1169
      %v1171 = vpop.f32.mrf.mxu0
      %v1172 = vadd.f32 %v819, %v1171
      %1173 = vmatprep.mubr.f32.mxu0 0.0
      %1174 = vmatmul.mubr.f32.gmra.mxu0 %v921
      %v1175 = vpop.f32.mrf.mxu0
      %v1176 = vadd.f32 %v824, %v1175
      %v1177 = vpop.f32.mrf.mxu0
      %v1178 = vadd.f32 %v824, %v1177
      %1179 = vdwg.mxu0
      %v1180 = vmax.f32 %v990, 0.0
      %v1181 = vmax.f32 %v992, 0.0
      %v1182 = vmax.f32 %v996, 0.0
      %v1183 = vmax.f32 %v998, 0.0
      %v1184 = vmax.f32 %v1002, 0.0
      %v1185 = vmax.f32 %v1004, 0.0
      %v1186 = vmax.f32 %v1008, 0.0
      %v1187 = vmax.f32 %v1010, 0.0
      %v1188 = vmax.f32 %v1014, 0.0
      %v1189 = vmax.f32 %v1016, 0.0
      %v1190 = vmax.f32 %v1020, 0.0
      %v1191 = vmax.f32 %v1022, 0.0
      %v1192 = vmax.f32 %v1026, 0.0
      %v1193 = vmax.f32 %v1028, 0.0
      %v1194 = vmax.f32 %v1032, 0.0
      %v1195 = vmax.f32 %v1034, 0.0
      %v1196 = vmax.f32 %v1038, 0.0
      %v1197 = vmax.f32 %v1040, 0.0
      %v1198 = vmax.f32 %v1044, 0.0
      %v1199 = vmax.f32 %v1046, 0.0
      %v1200 = vmax.f32 %v1050, 0.0
      %v1201 = vmax.f32 %v1052, 0.0
      %v1202 = vmax.f32 %v1056, 0.0
      %v1203 = vmax.f32 %v1058, 0.0
      %v1204 = vmax.f32 %v1062, 0.0
      %v1205 = vmax.f32 %v1064, 0.0
      %v1206 = vmax.f32 %v1068, 0.0
      %v1207 = vmax.f32 %v1070, 0.0
      %v1208 = vmax.f32 %v1074, 0.0
      %v1209 = vmax.f32 %v1076, 0.0
      %v1210 = vmax.f32 %v1080, 0.0
      %v1211 = vmax.f32 %v1082, 0.0
      %v1212 = vmax.f32 %v1086, 0.0
      %v1213 = vmax.f32 %v1088, 0.0
      %v1214 = vmax.f32 %v1092, 0.0
      %v1215 = vmax.f32 %v1094, 0.0
      %v1216 = vmax.f32 %v1098, 0.0
      %v1217 = vmax.f32 %v1100, 0.0
      %v1218 = vmax.f32 %v1104, 0.0
      %v1219 = vmax.f32 %v1106, 0.0
      %v1220 = vmax.f32 %v1110, 0.0
      %v1221 = vmax.f32 %v1112, 0.0
      %v1222 = vmax.f32 %v1116, 0.0
      %v1223 = vmax.f32 %v1118, 0.0
      %v1224 = vmax.f32 %v1122, 0.0
      %v1225 = vmax.f32 %v1124, 0.0
      %v1226 = vmax.f32 %v1128, 0.0
      %v1227 = vmax.f32 %v1130, 0.0
      %v1228 = vmax.f32 %v1134, 0.0
      %v1229 = vmax.f32 %v1136, 0.0
      %v1230 = vmax.f32 %v1140, 0.0
      %v1231 = vmax.f32 %v1142, 0.0
      %v1232 = vmax.f32 %v1146, 0.0
      %v1233 = vmax.f32 %v1148, 0.0
      %v1234 = vmax.f32 %v1152, 0.0
      %v1235 = vmax.f32 %v1154, 0.0
      %v1236 = vmax.f32 %v1158, 0.0
      %v1237 = vmax.f32 %v1160, 0.0
      %v1238 = vmax.f32 %v1164, 0.0
      %v1239 = vmax.f32 %v1166, 0.0
      %v1240 = vmax.f32 %v1170, 0.0
      %v1241 = vmax.f32 %v1172, 0.0
      %v1242 = vmax.f32 %v1176, 0.0
      %v1243 = vmax.f32 %v1178, 0.0
      %v1244 = vld [vmem:[%s5] sm:$0xff]
      %v1245 = vld [vmem:[%s5 + $0x8] sm:$0xff]
      %v1246 = vld [vmem:[%s5 + $0x10] sm:$0xff]
      %v1247 = vld [vmem:[%s5 + $0x18] sm:$0xff]
      %v1248 = vld [vmem:[%s5 + $0x20] sm:$0xff]
      %v1249 = vld [vmem:[%s5 + $0x28] sm:$0xff]
      %v1250 = vld [vmem:[%s5 + $0x30] sm:$0xff]
      %v1251 = vld [vmem:[%s5 + $0x38] sm:$0xff]
      %v1252 = vld [vmem:[%s6] sm:$0xff]
      %v1253 = vld [vmem:[%s6 + $0x8] sm:$0xff]
      %v1254 = vld [vmem:[%s6 + $0x10] sm:$0xff]
      %v1255 = vld [vmem:[%s6 + $0x18] sm:$0xff]
      %1257 = vset.pattern.permute.xlu0 0
      %1258 = vperm.xlu0 %1257, %v1252
      %v1259 = vpop.permute.xlu0 %1258
      %1262 = vset.pattern.permute.xlu0 0
      %1263 = vperm.xlu0 %1262, %v1253
      %v1264 = vpop.permute.xlu0 %1263
      %1267 = vset.pattern.permute.xlu0 0
      %1268 = vperm.xlu0 %1267, %v1254
      %v1269 = vpop.permute.xlu0 %1268
      %1272 = vset.pattern.permute.xlu0 0
      %1273 = vperm.xlu0 %1272, %v1255
      %v1274 = vpop.permute.xlu0 %1273
      %1276 = vmatprep.subr.mxu0 %v1211
      %1277 = vmatpush1.msra.mxu0 %v1210
      %1278 = vmatprep.subr.mxu0 %v1209
      %1279 = vmatpush1.msra.mxu0 %v1208
      %1280 = vmatprep.subr.mxu0 %v1207
      %1281 = vmatpush1.msra.mxu0 %v1206
      %1282 = vmatprep.subr.mxu0 %v1205
      %1283 = vmatpush1.msra.mxu0 %v1204
      %1284 = vmatprep.subr.mxu0 %v1203
      %1285 = vmatpush1.msra.mxu0 %v1202
      %1286 = vmatprep.subr.mxu0 %v1201
      %1287 = vmatpush1.msra.mxu0 %v1200
      %1288 = vmatprep.subr.mxu0 %v1199
      %1289 = vmatpush1.msra.mxu0 %v1198
      %1290 = vmatprep.subr.mxu0 %v1197
      %1291 = vmatpush1.msra.mxu0 %v1196
      %1292 = vmatprep.subr.mxu0 %v1195
      %1293 = vmatpush1.msra.mxu0 %v1194
      %1294 = vmatprep.subr.mxu0 %v1193
      %1295 = vmatpush1.msra.mxu0 %v1192
      %1296 = vmatprep.subr.mxu0 %v1191
      %1297 = vmatpush1.msra.mxu0 %v1190
      %1298 = vmatprep.subr.mxu0 %v1189
      %1299 = vmatpush1.msra.mxu0 %v1188
      %1300 = vmatprep.subr.mxu0 %v1187
      %1301 = vmatpush1.msra.mxu0 %v1186
      %1302 = vmatprep.subr.mxu0 %v1185
      %1303 = vmatpush1.msra.mxu0 %v1184
      %1304 = vmatprep.subr.mxu0 %v1183
      %1305 = vmatpush1.msra.mxu0 %v1182
      %1306 = vmatprep.subr.mxu0 %v1181
      %1307 = vmatpush1.msra.mxu0 %v1180
      %1308 = vmatprep.subr.mxu0 %v1243
      %1309 = vmatpush2.msra.mxu0 %v1242
      %1310 = vmatprep.subr.mxu0 %v1241
      %1311 = vmatpush2.msra.mxu0 %v1240
      %1312 = vmatprep.subr.mxu0 %v1239
      %1313 = vmatpush2.msra.mxu0 %v1238
      %1314 = vmatprep.subr.mxu0 %v1237
      %1315 = vmatpush2.msra.mxu0 %v1236
      %1316 = vmatprep.subr.mxu0 %v1235
      %1317 = vmatpush2.msra.mxu0 %v1234
      %1318 = vmatprep.subr.mxu0 %v1233
      %1319 = vmatpush2.msra.mxu0 %v1232
      %1320 = vmatprep.subr.mxu0 %v1231
      %1321 = vmatpush2.msra.mxu0 %v1230
      %1322 = vmatprep.subr.mxu0 %v1229
      %1323 = vmatpush2.msra.mxu0 %v1228
      %1324 = vmatprep.subr.mxu0 %v1227
      %1325 = vmatpush2.msra.mxu0 %v1226
      %1326 = vmatprep.subr.mxu0 %v1225
      %1327 = vmatpush2.msra.mxu0 %v1224
      %1328 = vmatprep.subr.mxu0 %v1223
      %1329 = vmatpush2.msra.mxu0 %v1222
      %1330 = vmatprep.subr.mxu0 %v1221
      %1331 = vmatpush2.msra.mxu0 %v1220
      %1332 = vmatprep.subr.mxu0 %v1219
      %1333 = vmatpush2.msra.mxu0 %v1218
      %1334 = vmatprep.subr.mxu0 %v1217
      %1335 = vmatpush2.msra.mxu0 %v1216
      %1336 = vmatprep.subr.mxu0 %v1215
      %1337 = vmatpush2.msra.mxu0 %v1214
      %1338 = vmatprep.subr.mxu0 %v1213
      %1339 = vmatpush2.msra.mxu0 %v1212
      %1340 = vmatprep.mubr.f32.mxu0 %v1245
      %1341 = vmatmul.mubr.f32.gmra.mxu0 %v1244
      %v1342 = vpop.f32.mrf.mxu0
      %v1343 = vadd.f32 %v1259, %v1342
      %v1344 = vpop.f32.mrf.mxu0
      %v1345 = vadd.f32 %v1259, %v1344
      %1346 = vmatprep.mubr.f32.mxu0 %v1247
      %1347 = vmatmul.mubr.f32.gmra.mxu0 %v1246
      %v1348 = vpop.f32.mrf.mxu0
      %v1349 = vadd.f32 %v1264, %v1348
      %v1350 = vpop.f32.mrf.mxu0
      %v1351 = vadd.f32 %v1264, %v1350
      %1352 = vmatprep.mubr.f32.mxu0 %v1249
      %1353 = vmatmul.mubr.f32.gmra.mxu0 %v1248
      %v1354 = vpop.f32.mrf.mxu0
      %v1355 = vadd.f32 %v1269, %v1354
      %v1356 = vpop.f32.mrf.mxu0
      %v1357 = vadd.f32 %v1269, %v1356
      %1358 = vmatprep.mubr.f32.mxu0 %v1251
      %1359 = vmatmul.mubr.f32.gmra.mxu0 %v1250
      %v1360 = vpop.f32.mrf.mxu0
      %v1361 = vadd.f32 %v1274, %v1360
      %v1362 = vpop.f32.mrf.mxu0
      %v1363 = vadd.f32 %v1274, %v1362
      %1364 = vdwg.mxu0
      %v1365 = vmax.f32 %v1343, 0.0
      %v1366 = vmax.f32 %v1345, 0.0
      %v1367 = vmax.f32 %v1349, 0.0
      %v1368 = vmax.f32 %v1351, 0.0
      %v1369 = vmax.f32 %v1355, 0.0
      %v1370 = vmax.f32 %v1357, 0.0
      %v1371 = vmax.f32 %v1361, 0.0
      %v1372 = vmax.f32 %v1363, 0.0
      %v1373 = vld [vmem:[%s7] sm:$0xf]
      %v1374 = vld [vmem:[%s8] sm:$0xf]
      %1376 = vset.pattern.permute.xlu0 0
      %1377 = vperm.xlu0 %1376, %v1374
      %v1378 = vpop.permute.xlu0 %1377
      %v1381 = vsel %vm826, %v1373, 0
      %1383 = vmatprep.subr.mxu0 0.0
      %1384 = vmatpush1.msra.mxu0 0.0
      %1385 = vmatprep.subr.mxu0 0.0
      %1386 = vmatpush1.msra.mxu0 0.0
      %1387 = vmatprep.subr.mxu0 0.0
      %1388 = vmatpush1.msra.mxu0 0.0
      %1389 = vmatprep.subr.mxu0 0.0
      %1390 = vmatpush1.msra.mxu0 0.0
      %1391 = vmatprep.subr.mxu0 0.0
      %1392 = vmatpush1.msra.mxu0 0.0
      %1393 = vmatprep.subr.mxu0 0.0
      %1394 = vmatpush1.msra.mxu0 0.0
      %1395 = vmatprep.subr.mxu0 0.0
      %1396 = vmatpush1.msra.mxu0 0.0
      %1397 = vmatprep.subr.mxu0 0.0
      %1398 = vmatpush1.msra.mxu0 0.0
      %1399 = vmatprep.subr.mxu0 0.0
      %1400 = vmatpush1.msra.mxu0 0.0
      %1401 = vmatprep.subr.mxu0 0.0
      %1402 = vmatpush1.msra.mxu0 0.0
      %1403 = vmatprep.subr.mxu0 0.0
      %1404 = vmatpush1.msra.mxu0 0.0
      %1405 = vmatprep.subr.mxu0 0.0
      %1406 = vmatpush1.msra.mxu0 0.0
      %1407 = vmatprep.subr.mxu0 %v1372
      %1408 = vmatpush1.msra.mxu0 %v1371
      %1409 = vmatprep.subr.mxu0 %v1370
      %1410 = vmatpush1.msra.mxu0 %v1369
      %1411 = vmatprep.subr.mxu0 %v1368
      %1412 = vmatpush1.msra.mxu0 %v1367
      %1413 = vmatprep.subr.mxu0 %v1366
      %1414 = vmatpush1.msra.mxu0 %v1365
      %1415 = vmatprep.subr.mxu0 0.0
      %1416 = vmatpush2.msra.mxu0 0.0
      %1417 = vmatprep.subr.mxu0 0.0
      %1418 = vmatpush2.msra.mxu0 0.0
      %1419 = vmatprep.subr.mxu0 0.0
      %1420 = vmatpush2.msra.mxu0 0.0
      %1421 = vmatprep.subr.mxu0 0.0
      %1422 = vmatpush2.msra.mxu0 0.0
      %1423 = vmatprep.subr.mxu0 0.0
      %1424 = vmatpush2.msra.mxu0 0.0
      %1425 = vmatprep.subr.mxu0 0.0
      %1426 = vmatpush2.msra.mxu0 0.0
      %1427 = vmatprep.subr.mxu0 0.0
      %1428 = vmatpush2.msra.mxu0 0.0
      %1429 = vmatprep.subr.mxu0 0.0
      %1430 = vmatpush2.msra.mxu0 0.0
      %1431 = vmatprep.subr.mxu0 0.0
      %1432 = vmatpush2.msra.mxu0 0.0
      %1433 = vmatprep.subr.mxu0 0.0
      %1434 = vmatpush2.msra.mxu0 0.0
      %1435 = vmatprep.subr.mxu0 0.0
      %1436 = vmatpush2.msra.mxu0 0.0
      %1437 = vmatprep.subr.mxu0 0.0
      %1438 = vmatpush2.msra.mxu0 0.0
      %1439 = vmatprep.subr.mxu0 0.0
      %1440 = vmatpush2.msra.mxu0 0.0
      %1441 = vmatprep.subr.mxu0 0.0
      %1442 = vmatpush2.msra.mxu0 0.0
      %1443 = vmatprep.subr.mxu0 0.0
      %1444 = vmatpush2.msra.mxu0 0.0
      %1445 = vmatprep.subr.mxu0 0.0
      %1446 = vmatpush2.msra.mxu0 0.0
      %1447 = vmatprep.mubr.f32.mxu0 0.0
      %1448 = vmatmul.mubr.f32.gmra.mxu0 %v1381
      %v1449 = vpop.f32.mrf.mxu0
      %v1450 = vadd.f32 %v1378, %v1449
      %v1451 = vpop.f32.mrf.mxu0
      %v1452 = vadd.f32 %v1378, %v1451
      %1453 = vdwg.mxu0
      %v1454 = vmul.f32 %v1450, %v1450
      %v1455 = vmul.f32 %v1452, %v1452
      %vm1456 = vcmask 1043456
      %v1457 = vsel %vm1456, %v1454, 0.0
      %v1458 = vrot.slane %v1457, 4
      %v1459 = vadd.f32 %v1457, %v1458
      %v1460 = vrot.slane %v1459, 2
      %v1461 = vadd.f32 %v1459, %v1460
      %v1462 = vrot.slane %v1461, 1
      %v1463 = vadd.f32 %v1461, %v1462
      %v1464 = vsel %vm1456, %v1455, 0.0
      %v1465 = vrot.slane %v1464, 4
      %v1466 = vadd.f32 %v1464, %v1465
      %v1467 = vrot.slane %v1466, 2
      %v1468 = vadd.f32 %v1466, %v1467
      %v1469 = vrot.slane %v1468, 1
      %v1470 = vadd.f32 %v1468, %v1469
      %v1471 = vrsqrt.pop %v1463
      %v1472 = vrsqrt.pop %v1470
      %v1473 = vmin.f32 %v1471, 1e+12
      %v1474 = vmin.f32 %v1472, 1e+12
      %v1475 = vmul.f32 %v1450, %v1473
      %v1476 = vmul.f32 %v1452, %v1474
      %v1479 = vcombine.low %v1475, %v1476
      %1481 = vst [vmem:[%s583] sm:$0xff] %v1479
      %v1482 = vld [vmem:[%s9] sm:$0x7]
      %v1483 = vld [vmem:[%s10] sm:$0x7]
      %1485 = vset.pattern.permute.xlu0 0
      %1486 = vperm.xlu0 %1485, %v1483
      %v1487 = vpop.permute.xlu0 %1486
      %v1490 = vsel %vm826, %v1482, 0
      %1492 = vmatprep.subr.mxu0 0.0
      %1493 = vmatpush1.msra.mxu0 0.0
      %1494 = vmatprep.subr.mxu0 0.0
      %1495 = vmatpush1.msra.mxu0 0.0
      %1496 = vmatprep.subr.mxu0 0.0
      %1497 = vmatpush1.msra.mxu0 0.0
      %1498 = vmatprep.subr.mxu0 0.0
      %1499 = vmatpush1.msra.mxu0 0.0
      %1500 = vmatprep.subr.mxu0 0.0
      %1501 = vmatpush1.msra.mxu0 0.0
      %1502 = vmatprep.subr.mxu0 0.0
      %1503 = vmatpush1.msra.mxu0 0.0
      %1504 = vmatprep.subr.mxu0 0.0
      %1505 = vmatpush1.msra.mxu0 0.0
      %1506 = vmatprep.subr.mxu0 0.0
      %1507 = vmatpush1.msra.mxu0 0.0
      %1508 = vmatprep.subr.mxu0 0.0
      %1509 = vmatpush1.msra.mxu0 0.0
      %1510 = vmatprep.subr.mxu0 0.0
      %1511 = vmatpush1.msra.mxu0 0.0
      %1512 = vmatprep.subr.mxu0 0.0
      %1513 = vmatpush1.msra.mxu0 0.0
      %1514 = vmatprep.subr.mxu0 0.0
      %1515 = vmatpush1.msra.mxu0 0.0
      %1516 = vmatprep.subr.mxu0 %v1372
      %1517 = vmatpush1.msra.mxu0 %v1371
      %1518 = vmatprep.subr.mxu0 %v1370
      %1519 = vmatpush1.msra.mxu0 %v1369
      %1520 = vmatprep.subr.mxu0 %v1368
      %1521 = vmatpush1.msra.mxu0 %v1367
      %1522 = vmatprep.subr.mxu0 %v1366
      %1523 = vmatpush1.msra.mxu0 %v1365
      %1524 = vmatprep.subr.mxu0 0.0
      %1525 = vmatpush2.msra.mxu0 0.0
      %1526 = vmatprep.subr.mxu0 0.0
      %1527 = vmatpush2.msra.mxu0 0.0
      %1528 = vmatprep.subr.mxu0 0.0
      %1529 = vmatpush2.msra.mxu0 0.0
      %1530 = vmatprep.subr.mxu0 0.0
      %1531 = vmatpush2.msra.mxu0 0.0
      %1532 = vmatprep.subr.mxu0 0.0
      %1533 = vmatpush2.msra.mxu0 0.0
      %1534 = vmatprep.subr.mxu0 0.0
      %1535 = vmatpush2.msra.mxu0 0.0
      %1536 = vmatprep.subr.mxu0 0.0
      %1537 = vmatpush2.msra.mxu0 0.0
      %1538 = vmatprep.subr.mxu0 0.0
      %1539 = vmatpush2.msra.mxu0 0.0
      %1540 = vmatprep.subr.mxu0 0.0
      %1541 = vmatpush2.msra.mxu0 0.0
      %1542 = vmatprep.subr.mxu0 0.0
      %1543 = vmatpush2.msra.mxu0 0.0
      %1544 = vmatprep.subr.mxu0 0.0
      %1545 = vmatpush2.msra.mxu0 0.0
      %1546 = vmatprep.subr.mxu0 0.0
      %1547 = vmatpush2.msra.mxu0 0.0
      %1548 = vmatprep.subr.mxu0 0.0
      %1549 = vmatpush2.msra.mxu0 0.0
      %1550 = vmatprep.subr.mxu0 0.0
      %1551 = vmatpush2.msra.mxu0 0.0
      %1552 = vmatprep.subr.mxu0 0.0
      %1553 = vmatpush2.msra.mxu0 0.0
      %1554 = vmatprep.subr.mxu0 0.0
      %1555 = vmatpush2.msra.mxu0 0.0
      %1556 = vmatprep.mubr.f32.mxu0 0.0
      %1557 = vmatmul.mubr.f32.gmra.mxu0 %v1490
      %v1558 = vpop.f32.mrf.mxu0
      %v1559 = vadd.f32 %v1487, %v1558
      %v1560 = vpop.f32.mrf.mxu0
      %v1561 = vadd.f32 %v1487, %v1560
      %1562 = vdwg.mxu0
      %v1563 = vtanh.pop %v1559
      %v1564 = vtanh.pop %v1561
      %v1565 = vmul.f32 %v1563, 0.5
      %v1566 = vmul.f32 %v1564, 0.5
      %v1569 = vcombine.low %v1565, %v1566
      %1571 = vst [vmem:[%s573] sm:$0x77] %v1569
      %v1572 = vld [vmem:[%s554] sm:$0x77]
      %v1574 = vcombine.high %v1572, %v1572
      %v1576 = vsub.f32 %v1565, %v1572
      %v1577 = vsub.f32 %v1566, %v1574
      %v1578 = vand.u32 2147483647, %v1576
      %v1579 = vand.u32 2147483647, %v1577
      %vm1580 = vcmask 1042432
      %v1581 = vsel %vm1580, %v1578, 0.0
      %v1582 = vrot.slane %v1581, 4
      %v1583 = vadd.f32 %v1581, %v1582
      %v1584 = vrot.slane %v1583, 2
      %v1585 = vadd.f32 %v1583, %v1584
      %v1586 = vrot.slane %v1585, 1
      %v1587 = vadd.f32 %v1585, %v1586
      %v1588 = vsel %vm1580, %v1579, 0.0
      %v1589 = vrot.slane %v1588, 4
      %v1590 = vadd.f32 %v1588, %v1589
      %v1591 = vrot.slane %v1590, 2
      %v1592 = vadd.f32 %v1590, %v1591
      %v1593 = vrot.slane %v1592, 1
      %v1594 = vadd.f32 %v1592, %v1593
      %v1595 = vld [vmem:[%s563] sm:$0x3]
      %v1597 = vlaneseq
      %v1598 = vshrl.u32 %v1597, 7
      %v1599 = vsub.s32 0, %v1598
      %v1600 = vrot.slane %v1595, %v1599
      %v1601 = vlaneseq
      %v1602 = vshrl.u32 %v1601, 7
      %v1603 = vsub.s32 1, %v1602
      %v1604 = vrot.slane %v1595, %v1603
      %v1607 = vmul.f32 %v1587, %v1600
      %v1608 = vmul.f32 %v1594, %v1604
      %v1611 = vcombine.low %v1607, %v1608
      %v1613 = vunpack.c.l.s4 1966171168
      %v1614 = vunpack.c.0.s8 %v1613
      %v1615 = vlaneseq
      %v1616 = vshrl.u32 %v1615, 7
      %v1617 = vsub.s32 %v1614, %v1616
      %v1618 = vrot.slane %v1611, %v1617
      %v1620 = vunpack.c.l.s4 1966171168
      %v1621 = vunpack.c.0.s8 %v1620
      %v1622 = vlaneseq
      %v1623 = vshrl.u32 %v1622, 7
      %v1624 = vsub.s32 %v1621, %v1623
      %v1625 = vrot.slane %v1618, %v1624
      %v1627 = vlaneseq
      %vm1628 = vcmp.ge.s32.totalorder %v1627, 0
      %vm1629 = vcmp.lt.s32.totalorder %v1627, 256
      %vm1630 = vmand %vm1628, %vm1629
      %1631 = vst.msk [vmem:[%s592] sm:$0x3] %vm1630, %v1625
      %s1632 = smul.u32 2, %s30
      %p1633 = scmp.lt.s32.totalorder %s29, 1
      %s1634 = scalar_select %p1633, %s29, 1
      %p1635 = scmp.lt.s32.totalorder %s1632, 1
      %s1636 = scalar_select %p1635, %s1632, 1
      %s1637 = smul.addr %s1634, 2
      %s1638 = sadd.s32 %s1636, %s1637
      %s1639 = smul.addr %s1638, 4
      %s1640 = scalar_lea.vmem %s11, %s1639
      %s1641 = smul.u32 2, %s30
      %p1642 = scmp.lt.s32.totalorder %s29, 1
      %s1643 = scalar_select %p1642, %s29, 1
      %p1644 = scmp.lt.s32.totalorder %s1641, 1
      %s1645 = scalar_select %p1644, %s1641, 1
      %s1646 = smul.addr %s1643, 2
      %s1647 = sadd.s32 %s1645, %s1646
      %s1648 = smul.addr %s1647, 4
      %s1649 = scalar_lea.vmem %s12, %s1648
      %s1650 = smul.u32 2, %s30
      %p1651 = scmp.lt.s32.totalorder %s29, 1
      %s1652 = scalar_select %p1651, %s29, 1
      %p1653 = scmp.lt.s32.totalorder %s1650, 1
      %s1654 = scalar_select %p1653, %s1650, 1
      %s1655 = smul.addr %s1652, 2
      %s1656 = sadd.s32 %s1654, %s1655
      %s1657 = scalar_lea.vmem %s13, %s1656
      // Predicated region
      $region65: #{view_net_forward.1} parent=63 // pred_check
        %p1658 = pneg %p309
      $region66: #{view_net_forward.1} parent=63 // pred_check_branch
        %1660 = sbr.rel (%p1658) target = $region68
      $region67: #{view_net_forward.1} parent=63 // pred_region
        %s1661 = smul.u32 2, %s30
      $region68: #{view_net_forward.1} parent=63 // pred_fallthru
        _
      // Predicated region
      $region69: #{view_net_forward.1} parent=63 // pred_check
        %p1662 = pneg %p337
      $region70: #{view_net_forward.1} parent=63 // pred_check_branch
        %1664 = sbr.rel (%p1662) target = $region72
      $region71: #{view_net_forward.1} parent=63 // pred_region
        %s1665 = smul.u32 2, %s30
      $region72: #{view_net_forward.1} parent=63 // pred_fallthru
        _
      // Predicated region
      $region73: #{view_net_forward.1} parent=63 // pred_check
        %p1666 = pneg %p365
      $region74: #{view_net_forward.1} parent=63 // pred_check_branch
        %1668 = sbr.rel (%p1666) target = $region76
      $region75: #{view_net_forward.1} parent=63 // pred_region
        %s1669 = smul.u32 2, %s30
      $region76: #{view_net_forward.1} parent=63 // pred_fallthru
        _
    $region64: #{view_net_forward.1} parent=5 // pred_fallthru
      _
    %p1670 = scmp.le.s32.totalorder 2, %s20
    // Predicated region
    $region77: #{view_net_forward.1} parent=5 // pred_check
      %p1671 = pneg %p1670
    $region78: #{view_net_forward.1} parent=5 // pred_check_branch
      %1673 = sbr.rel (%p1671) target = $region80
    $region79: #{view_net_forward.1} parent=5 // pred_region
      %s1674 = ssub.s32 %s20, 2
      // Predicated region
      $region81: #{view_net_forward.1} parent=79 // pred_check
        %p1675 = pneg %p315
      $region82: #{view_net_forward.1} parent=79 // pred_check_branch
        %1677 = sbr.rel (%p1675) target = $region84
      $region83: #{view_net_forward.1} parent=79 // pred_region
        %s1678 = smul.u32 2, %s32
        %p1679 = scmp.lt.s32.totalorder %s31, 1
        %s1680 = scalar_select %p1679, %s31, 1
        %p1681 = scmp.lt.s32.totalorder %s1678, 1
        %s1682 = scalar_select %p1681, %s1678, 1
        %s1683 = smul.addr %s1680, 2
        %s1684 = sadd.s32 %s1682, %s1683
        %s1685 = smul.addr %s1684, 4
        %s1686 = scalar_lea.vmem %s11, %s1685
      $region84: #{view_net_forward.1} parent=79 // pred_fallthru
        _
      // Predicated region
      $region85: #{view_net_forward.1} parent=79 // pred_check
        %p1687 = pneg %p343
      $region86: #{view_net_forward.1} parent=79 // pred_check_branch
        %1689 = sbr.rel (%p1687) target = $region88
      $region87: #{view_net_forward.1} parent=79 // pred_region
        %s1690 = smul.u32 2, %s32
        %p1691 = scmp.lt.s32.totalorder %s31, 1
        %s1692 = scalar_select %p1691, %s31, 1
        %p1693 = scmp.lt.s32.totalorder %s1690, 1
        %s1694 = scalar_select %p1693, %s1690, 1
        %s1695 = smul.addr %s1692, 2
        %s1696 = sadd.s32 %s1694, %s1695
        %s1697 = smul.addr %s1696, 4
        %s1698 = scalar_lea.vmem %s12, %s1697
      $region88: #{view_net_forward.1} parent=79 // pred_fallthru
        _
      // Predicated region
      $region89: #{view_net_forward.1} parent=79 // pred_check
        %p1699 = pneg %p371
      $region90: #{view_net_forward.1} parent=79 // pred_check_branch
        %1701 = sbr.rel (%p1699) target = $region92
      $region91: #{view_net_forward.1} parent=79 // pred_region
        %s1702 = smul.u32 2, %s32
        %p1703 = scmp.lt.s32.totalorder %s31, 1
        %s1704 = scalar_select %p1703, %s31, 1
        %p1705 = scmp.lt.s32.totalorder %s1702, 1
        %s1706 = scalar_select %p1705, %s1702, 1
        %s1707 = smul.addr %s1704, 2
        %s1708 = sadd.s32 %s1706, %s1707
        %s1709 = scalar_lea.vmem %s13, %s1708
      $region92: #{view_net_forward.1} parent=79 // pred_fallthru
        _
    $region80: #{view_net_forward.1} parent=5 // pred_fallthru
      _
  $region6: #{view_net_forward.1} parent=0 // loop_footer
    %s24 = sadd.s32 1, %s20
  $region7: #{view_net_forward.1} parent=0 // loop_footer_branch
    %19 = sbr.rel target = $region3
  $region8: #{view_net_forward.1} parent=0 // loop_exit
    _

</llo_original>
